<compile_context>
chip_gen: v5e
topology: v5e:2x2
jax: 0.10.0
libtpu: 0.0.40
codegen_flags: <defaults>
</compile_context>

<pallas_src>
import functools

import jax
import jax.numpy as jnp
from jax.experimental import pallas as pl
from jax.experimental.pallas import tpu as pltpu


LANE = 128


def _round_up(x, m):
    return ((x + m - 1) // m) * m


def _pick_tile(n_pad, cap):
    """Largest power-of-two multiple of 256 that divides n_pad and is <= cap."""
    t = 256
    while t * 2 <= cap and n_pad % (t * 2) == 0:
        t *= 2
    return t


def plan_tiles(num_nodes):
    """Adaptive (n_pad, tm, tk) for a graph with `num_nodes` nodes."""
    n_pad = _round_up(max(num_nodes, 1), 256)
    # Keep >= 2 row tiles when possible so the "parallel" row axis can shard
    # across both v7x TensorCores; harmless on v5e/v6e.
    tm_cap = n_pad if n_pad < 512 else min(1024, n_pad // 2)
    tm = _pick_tile(n_pad, tm_cap)
    tk = _pick_tile(n_pad, 1024)
    return n_pad, tm, tk


# ---------------------------------------------------------------------------
# Pallas kernel: one GCN layer  out = act((A_hat @ M) @ W + b)
#   A_hat tile : (tm, tk) bf16, streamed over (row, K)
#   M          : (n_pad, C_in_pad) bf16, VMEM-resident, sliced per K step
#   W          : (C_in_pad, C_out_pad) bf16 (resident)
#   b          : (1, C_out_pad) f32 (resident)
#   acc scratch: (tm, C_in_pad) f32, persists across the K grid axis
# ---------------------------------------------------------------------------
def _gcn_layer_kernel(a_ref, m_ref, w_ref, b_ref, o_ref, acc_ref, *, apply_relu, tk):
    k = pl.program_id(1)

    @pl.when(k == 0)
    def _():
        acc_ref[...] = jnp.zeros_like(acc_ref)

    # Slice the resident feature operand for this K step (aligned, tk | start).
    start = pl.multiple_of(k * tk, tk)
    m_tile = m_ref[pl.ds(start, tk), :]

    # Aggregation: A_hat[i, k] @ M[k]  (bf16 x bf16 -> f32 accumulate on MXU)
    acc_ref[...] += jnp.dot(a_ref[...], m_tile, preferred_element_type=jnp.float32)

    @pl.when(k == pl.num_programs(1) - 1)
    def _():
        # Fused feature transform + bias (+ ReLU) epilogue, once per row tile.
        out = jnp.dot(
            acc_ref[...].astype(jnp.bfloat16),
            w_ref[...],
            preferred_element_type=jnp.float32,
        )
        out = out + b_ref[...]
        if apply_relu:
            out = jnp.maximum(out, 0.0)
        o_ref[...] = out.astype(o_ref.dtype)


def gcn_layer(a_hat_p, m_p, w_p, b_p, *, apply_relu, tm, tk, out_dtype):
    """One GCNConv layer on padded operands as a tiled Pallas call."""
    n_pad = a_hat_p.shape[0]
    c_in_pad = m_p.shape[1]
    c_out_pad = w_p.shape[1]
    assert n_pad % tm == 0 and n_pad % tk == 0

    kernel = functools.partial(_gcn_layer_kernel, apply_relu=apply_relu, tk=tk)
    grid = (n_pad // tm, n_pad // tk)

    # Explicit scoped-VMEM budget (v5e default is only 16 MiB).
    vmem_est = (
        2 * tm * tk * 2              # A_hat, double-buffered bf16
        + 2 * n_pad * c_in_pad * 2   # resident M (buffer pair) bf16
        + 2 * tm * c_out_pad * 4     # output tiles
        + tm * c_in_pad * 4          # f32 accumulator scratch
        + 2 * (c_in_pad * c_out_pad * 2 + c_out_pad * 4)  # W + bias
    )
    vmem_limit = int(min(64 * 1024 * 1024, max(2 * vmem_est, 32 * 1024 * 1024)))

    return pl.pallas_call(
        kernel,
        out_shape=jax.ShapeDtypeStruct((n_pad, c_out_pad), out_dtype),
        grid_spec=pltpu.PrefetchScalarGridSpec(
            num_scalar_prefetch=0,
            grid=grid,
            in_specs=[
                # A_hat tile streamed over (row, K)
                pl.BlockSpec((tm, tk), lambda i, k: (i, k)),
                # node features: whole (padded) operand, VMEM-resident
                pl.BlockSpec((n_pad, c_in_pad), lambda i, k: (0, 0)),
                # weight + bias: full (tiny), resident
                pl.BlockSpec((c_in_pad, c_out_pad), lambda i, k: (0, 0)),
                pl.BlockSpec((1, c_out_pad), lambda i, k: (0, 0)),
            ],
            out_specs=pl.BlockSpec((tm, c_out_pad), lambda i, k: (i, 0)),
            scratch_shapes=[pltpu.VMEM((tm, c_in_pad), jnp.float32)],
        ),
        compiler_params=pltpu.CompilerParams(
            dimension_semantics=("parallel", "arbitrary"),
            vmem_limit_bytes=vmem_limit,
        ),
    )(a_hat_p, m_p, w_p, b_p)


# ---------------------------------------------------------------------------
# Graph preprocessing: D^-1/2 (A + I) D^-1/2, padded to the tile grid and cast
# to bf16.  Built ONCE per graph and cached by the caller -- not part of the
# per-forward hot path (no per-call N^2 pad/cast traffic).
# ---------------------------------------------------------------------------
def normalized_adjacency_padded(edge_index, num_nodes, n_pad, dtype=jnp.bfloat16):
    src = edge_index[0]
    dst = edge_index[1]
    loop = jnp.arange(num_nodes, dtype=edge_index.dtype)  # self-loops (PyG default)
    src = jnp.concatenate([src, loop])
    dst = jnp.concatenate([dst, loop])
    ones = jnp.ones_like(dst, dtype=jnp.float32)
    deg = jnp.zeros((num_nodes,), jnp.float32).at[dst].add(ones)
    dinv = jnp.where(deg > 0, 1.0 / jnp.sqrt(deg), 0.0)
    norm = dinv[src] * dinv[dst]
    # Scatter directly into the padded buffer; padded rows/cols stay zero.
    a_hat = jnp.zeros((n_pad, n_pad), jnp.float32).at[dst, src].add(norm)
    return a_hat.astype(dtype)


# ---------------------------------------------------------------------------
# Full GNN forward: GCNConv -> ReLU -> Dropout(eval) -> GCNConv
# `a_hat_p` is the pre-padded bf16 normalized adjacency (built once per graph).
# ---------------------------------------------------------------------------
def gnn_forward(x, a_hat_p, params, *, tm, tk):
    n, c_in = x.shape
    n_pad = a_hat_p.shape[0]
    hidden = params["w1"].shape[1]
    c_out = params["w2"].shape[1]

    c_in_p = _round_up(c_in, LANE)
    hid_p = _round_up(hidden, LANE)
    c_out_p = _round_up(c_out, LANE)

    # Small per-call pads (node features + tiny weights); padding is zero so it
    # contributes nothing to any sum.
    x_p = jnp.pad(x, ((0, n_pad - n), (0, c_in_p - c_in))).astype(jnp.bfloat16)
    w1_p = jnp.pad(params["w1"], ((0, c_in_p - c_in), (0, hid_p - hidden))).astype(jnp.bfloat16)
    b1_p = jnp.pad(params["b1"], ((0, 0), (0, hid_p - hidden)))
    w2_p = jnp.pad(params["w2"], ((0, hid_p - hidden), (0, c_out_p - c_out))).astype(jnp.bfloat16)
    b2_p = jnp.pad(params["b2"], ((0, 0), (0, c_out_p - c_out)))

    # Layer 1: relu((A_hat @ X) @ W1 + b1); output stays padded + bf16 so it
    # streams straight into layer 2 as the resident feature operand.
    h_p = gcn_layer(
        a_hat_p, x_p, w1_p, b1_p, apply_relu=True, tm=tm, tk=tk, out_dtype=jnp.bfloat16
    )

    # TODO(synk): Dropout(0.1) is identity in eval mode; training-mode dropout
    # (Bernoulli mask + 1/(1-p) rescale via pltpu.prng_*) is not implemented.

    # Layer 2: (A_hat @ H) @ W2 + b2
    out_p = gcn_layer(
        a_hat_p, h_p, w2_p, b2_p, apply_relu=False, tm=tm, tk=tk, out_dtype=jnp.float32
    )

    return out_p[:n, :c_out]


def init_params(key, in_channels, hidden_channels, out_channels):
    k1, k2 = jax.random.split(key)

    def glorot(k, fan_in, fan_out):
        limit = jnp.sqrt(6.0 / (fan_in + fan_out))
        return jax.random.uniform(
            k, (fan_in, fan_out), jnp.float32, minval=-limit, maxval=limit
        )

    return {
        "w1": glorot(k1, in_channels, hidden_channels),
        "b1": jnp.zeros((1, hidden_channels), jnp.float32),
        "w2": glorot(k2, hidden_channels, out_channels),
        "b2": jnp.zeros((1, out_channels), jnp.float32),
    }


if __name__ == "__main__":
    key = jax.random.PRNGKey(0)
    k_x, k_e, k_p = jax.random.split(key, 3)

    num_nodes = 8
    num_edges = 16
    in_channels = 4
    hidden_channels = 16
    out_channels = 4

    x = jax.random.normal(k_x, (num_nodes, in_channels), jnp.float32)
    edge_index = jax.random.randint(
        k_e, (2, num_edges), minval=0, maxval=num_nodes, dtype=jnp.int32
    )
    params = init_params(k_p, in_channels, hidden_channels, out_channels)

    # Per-graph preprocessing: pick tiles and build the padded bf16 A_hat ONCE.
    n_pad, tm, tk = plan_tiles(num_nodes)
    a_hat_p = jax.block_until_ready(
        normalized_adjacency_padded(edge_index, num_nodes, n_pad)
    )

    fwd = jax.jit(functools.partial(gnn_forward, tm=tm, tk=tk))
    out = fwd(x, a_hat_p, params)
    jax.block_until_ready(out)
    assert out.shape == (num_nodes, out_channels)
    print("KERNEL_OK")
</pallas_src>

<mosaic_0001>
module attributes {stable_mosaic.version = 11 : i64} {
  func.func @_gcn_layer_kernel(%arg0: i32, %arg1: i32, %arg2: memref<256x256xbf16, #tpu.memory_space<vmem>>, %arg3: memref<256x128xbf16, #tpu.memory_space<vmem>>, %arg4: memref<128x128xbf16, #tpu.memory_space<vmem>>, %arg5: memref<1x128xf32, #tpu.memory_space<vmem>>, %arg6: memref<256x128xbf16, #tpu.memory_space<vmem>>, %arg7: memref<256x128xf32, #tpu.memory_space<vmem>>) attributes {dimension_semantics = [#tpu.dimension_semantics<parallel>, #tpu.dimension_semantics<arbitrary>], iteration_bounds = array<i64: 1, 1>, scalar_prefetch = 0 : i64, scratch_operands = 1 : i64, tpu.core_type = #tpu.core_type<tc>, window_params = [{transform_indices = @transform_0, window_bounds = array<i64: 256, 256>}, {pipeline_mode = #tpu.pipeline_mode<synchronous>, transform_indices = @transform_1, window_bounds = array<i64: 256, 128>}, {pipeline_mode = #tpu.pipeline_mode<synchronous>, transform_indices = @transform_2, window_bounds = array<i64: 128, 128>}, {pipeline_mode = #tpu.pipeline_mode<synchronous>, transform_indices = @transform_3, window_bounds = array<i64: 1, 128>}, {transform_indices = @transform_4, window_bounds = array<i64: 256, 128>}]} {
    %c0_i32 = arith.constant 0 : i32
    %0 = arith.cmpi eq, %arg1, %c0_i32 : i32
    %1 = arith.extui %0 : i1 to i32
    %c0_i32_0 = arith.constant 0 : i32
    %2 = arith.cmpi ne, %1, %c0_i32_0 : i32
    scf.if %2 {
      %cst_9 = arith.constant 0.000000e+00 : f32
      %15 = vector.broadcast %cst_9 : f32 to vector<256x128xf32>
      %c0_10 = arith.constant 0 : index
      %c0_11 = arith.constant 0 : index
      %16 = vector.load %arg7[%c0_10, %c0_11] : memref<256x128xf32, #tpu.memory_space<vmem>>, vector<256x128xf32>
      tpu.vector_store %arg7[%c0_10, %c0_11], %15 {strides = array<i32>} : memref<256x128xf32, #tpu.memory_space<vmem>>, vector<256x128xf32>,
    } else {
    }
    %c256_i32 = arith.constant 256 : i32
    %3 = arith.muli %arg1, %c256_i32 : i32
    %4 = tpu.assume_multiple %3, 256 : i32
    %5 = arith.index_cast %4 : i32 to index
    %c0 = arith.constant 0 : index
    %6 = vector.load %arg3[%5, %c0] : memref<256x128xbf16, #tpu.memory_space<vmem>>, vector<256x128xbf16>
    %c0_1 = arith.constant 0 : index
    %c0_2 = arith.constant 0 : index
    %7 = vector.load %arg7[%c0_1, %c0_2] : memref<256x128xf32, #tpu.memory_space<vmem>>, vector<256x128xf32>
    %c0_3 = arith.constant 0 : index
    %c0_4 = arith.constant 0 : index
    %8 = vector.load %arg2[%c0_3, %c0_4] : memref<256x256xbf16, #tpu.memory_space<vmem>>, vector<256x256xbf16>
    %cst = arith.constant dense<0.000000e+00> : vector<256x128xf32>
    %9 = tpu.matmul %8, %6, %cst {dimension_numbers = #tpu.dot_dimension_numbers<[1], [0], [0], [1], [0, 0, 1, 1], [], []>} : vector<256x256xbf16>, vector<256x128xbf16>, vector<256x128xf32> -> vector<256x128xf32>
    %10 = arith.addf %7, %9 : vector<256x128xf32>
    %c0_5 = arith.constant 0 : index
    %c0_6 = arith.constant 0 : index
    %11 = vector.load %arg7[%c0_5, %c0_6] : memref<256x128xf32, #tpu.memory_space<vmem>>, vector<256x128xf32>
    tpu.vector_store %arg7[%c0_5, %c0_6], %10 {strides = array<i32>} : memref<256x128xf32, #tpu.memory_space<vmem>>, vector<256x128xf32>,
    %c0_i32_7 = arith.constant 0 : i32
    %12 = arith.cmpi eq, %arg1, %c0_i32_7 : i32
    %13 = arith.extui %12 : i1 to i32
    %c0_i32_8 = arith.constant 0 : i32
    %14 = arith.cmpi ne, %13, %c0_i32_8 : i32
    scf.if %14 {
      %c0_9 = arith.constant 0 : index
      %c0_10 = arith.constant 0 : index
      %15 = vector.load %arg7[%c0_9, %c0_10] : memref<256x128xf32, #tpu.memory_space<vmem>>, vector<256x128xf32>
      %16 = arith.truncf %15 : vector<256x128xf32> to vector<256x128xbf16>
      %c0_11 = arith.constant 0 : index
      %c0_12 = arith.constant 0 : index
      %17 = vector.load %arg4[%c0_11, %c0_12] : memref<128x128xbf16, #tpu.memory_space<vmem>>, vector<128x128xbf16>
      %cst_13 = arith.constant dense<0.000000e+00> : vector<256x128xf32>
      %18 = tpu.matmul %16, %17, %cst_13 {dimension_numbers = #tpu.dot_dimension_numbers<[1], [0], [0], [1], [0, 0, 1, 1], [], []>} : vector<256x128xbf16>, vector<128x128xbf16>, vector<256x128xf32> -> vector<256x128xf32>
      %c0_14 = arith.constant 0 : index
      %c0_15 = arith.constant 0 : index
      %19 = vector.load %arg5[%c0_14, %c0_15] : memref<1x128xf32, #tpu.memory_space<vmem>>, vector<1x128xf32>
      %20 = vector.broadcast %19 : vector<1x128xf32> to vector<256x128xf32>
      %21 = arith.addf %18, %20 : vector<256x128xf32>
      %cst_16 = arith.constant 0.000000e+00 : f32
      %22 = vector.broadcast %cst_16 : f32 to vector<256x128xf32>
      %23 = arith.maximumf %21, %22 : vector<256x128xf32>
      %24 = arith.truncf %23 : vector<256x128xf32> to vector<256x128xbf16>
      %c0_17 = arith.constant 0 : index
      %c0_18 = arith.constant 0 : index
      %25 = vector.load %arg6[%c0_17, %c0_18] : memref<256x128xbf16, #tpu.memory_space<vmem>>, vector<256x128xbf16>
      tpu.vector_store %arg6[%c0_17, %c0_18], %24 {strides = array<i32>} : memref<256x128xbf16, #tpu.memory_space<vmem>>, vector<256x128xbf16>,
    } else {
    }
    return
  }
  func.func @transform_0(%arg0: i32, %arg1: i32) -> (i32, i32) {
    %c0_i32 = arith.constant 0 : i32
    return %arg0, %arg1 : i32, i32
  }
  func.func @transform_1(%arg0: i32, %arg1: i32) -> (i32, i32) {
    %c0_i32 = arith.constant 0 : i32
    %c0_i32_0 = arith.constant 0 : i32
    %c0_i32_1 = arith.constant 0 : i32
    return %c0_i32, %c0_i32_0 : i32, i32
  }
  func.func @transform_2(%arg0: i32, %arg1: i32) -> (i32, i32) {
    %c0_i32 = arith.constant 0 : i32
    %c0_i32_0 = arith.constant 0 : i32
    %c0_i32_1 = arith.constant 0 : i32
    return %c0_i32, %c0_i32_0 : i32, i32
  }
  func.func @transform_3(%arg0: i32, %arg1: i32) -> (i32, i32) {
    %c0_i32 = arith.constant 0 : i32
    %c0_i32_0 = arith.constant 0 : i32
    %c0_i32_1 = arith.constant 0 : i32
    return %c0_i32, %c0_i32_0 : i32, i32
  }
  func.func @transform_4(%arg0: i32, %arg1: i32) -> (i32, i32) {
    %c0_i32 = arith.constant 0 : i32
    %c0_i32_0 = arith.constant 0 : i32
    return %arg0, %c0_i32 : i32, i32
  }
}

module attributes {stable_mosaic.version = 11 : i64} {
  func.func @_gcn_layer_kernel(%arg0: i32, %arg1: i32, %arg2: memref<256x256xbf16, #tpu.memory_space<vmem>>, %arg3: memref<256x128xbf16, #tpu.memory_space<vmem>>, %arg4: memref<128x128xbf16, #tpu.memory_space<vmem>>, %arg5: memref<1x128xf32, #tpu.memory_space<vmem>>, %arg6: memref<256x128xf32, #tpu.memory_space<vmem>>, %arg7: memref<256x128xf32, #tpu.memory_space<vmem>>) attributes {dimension_semantics = [#tpu.dimension_semantics<parallel>, #tpu.dimension_semantics<arbitrary>], iteration_bounds = array<i64: 1, 1>, scalar_prefetch = 0 : i64, scratch_operands = 1 : i64, tpu.core_type = #tpu.core_type<tc>, window_params = [{transform_indices = @transform_0, window_bounds = array<i64: 256, 256>}, {pipeline_mode = #tpu.pipeline_mode<synchronous>, transform_indices = @transform_1, window_bounds = array<i64: 256, 128>}, {pipeline_mode = #tpu.pipeline_mode<synchronous>, transform_indices = @transform_2, window_bounds = array<i64: 128, 128>}, {pipeline_mode = #tpu.pipeline_mode<synchronous>, transform_indices = @transform_3, window_bounds = array<i64: 1, 128>}, {transform_indices = @transform_4, window_bounds = array<i64: 256, 128>}]} {
    %c0_i32 = arith.constant 0 : i32
    %0 = arith.cmpi eq, %arg1, %c0_i32 : i32
    %1 = arith.extui %0 : i1 to i32
    %c0_i32_0 = arith.constant 0 : i32
    %2 = arith.cmpi ne, %1, %c0_i32_0 : i32
    scf.if %2 {
      %cst_9 = arith.constant 0.000000e+00 : f32
      %15 = vector.broadcast %cst_9 : f32 to vector<256x128xf32>
      %c0_10 = arith.constant 0 : index
      %c0_11 = arith.constant 0 : index
      %16 = vector.load %arg7[%c0_10, %c0_11] : memref<256x128xf32, #tpu.memory_space<vmem>>, vector<256x128xf32>
      tpu.vector_store %arg7[%c0_10, %c0_11], %15 {strides = array<i32>} : memref<256x128xf32, #tpu.memory_space<vmem>>, vector<256x128xf32>,
    } else {
    }
    %c256_i32 = arith.constant 256 : i32
    %3 = arith.muli %arg1, %c256_i32 : i32
    %4 = tpu.assume_multiple %3, 256 : i32
    %5 = arith.index_cast %4 : i32 to index
    %c0 = arith.constant 0 : index
    %6 = vector.load %arg3[%5, %c0] : memref<256x128xbf16, #tpu.memory_space<vmem>>, vector<256x128xbf16>
    %c0_1 = arith.constant 0 : index
    %c0_2 = arith.constant 0 : index
    %7 = vector.load %arg7[%c0_1, %c0_2] : memref<256x128xf32, #tpu.memory_space<vmem>>, vector<256x128xf32>
    %c0_3 = arith.constant 0 : index
    %c0_4 = arith.constant 0 : index
    %8 = vector.load %arg2[%c0_3, %c0_4] : memref<256x256xbf16, #tpu.memory_space<vmem>>, vector<256x256xbf16>
    %cst = arith.constant dense<0.000000e+00> : vector<256x128xf32>
    %9 = tpu.matmul %8, %6, %cst {dimension_numbers = #tpu.dot_dimension_numbers<[1], [0], [0], [1], [0, 0, 1, 1], [], []>} : vector<256x256xbf16>, vector<256x128xbf16>, vector<256x128xf32> -> vector<256x128xf32>
    %10 = arith.addf %7, %9 : vector<256x128xf32>
    %c0_5 = arith.constant 0 : index
    %c0_6 = arith.constant 0 : index
    %11 = vector.load %arg7[%c0_5, %c0_6] : memref<256x128xf32, #tpu.memory_space<vmem>>, vector<256x128xf32>
    tpu.vector_store %arg7[%c0_5, %c0_6], %10 {strides = array<i32>} : memref<256x128xf32, #tpu.memory_space<vmem>>, vector<256x128xf32>,
    %c0_i32_7 = arith.constant 0 : i32
    %12 = arith.cmpi eq, %arg1, %c0_i32_7 : i32
    %13 = arith.extui %12 : i1 to i32
    %c0_i32_8 = arith.constant 0 : i32
    %14 = arith.cmpi ne, %13, %c0_i32_8 : i32
    scf.if %14 {
      %c0_9 = arith.constant 0 : index
      %c0_10 = arith.constant 0 : index
      %15 = vector.load %arg7[%c0_9, %c0_10] : memref<256x128xf32, #tpu.memory_space<vmem>>, vector<256x128xf32>
      %16 = arith.truncf %15 : vector<256x128xf32> to vector<256x128xbf16>
      %c0_11 = arith.constant 0 : index
      %c0_12 = arith.constant 0 : index
      %17 = vector.load %arg4[%c0_11, %c0_12] : memref<128x128xbf16, #tpu.memory_space<vmem>>, vector<128x128xbf16>
      %cst_13 = arith.constant dense<0.000000e+00> : vector<256x128xf32>
      %18 = tpu.matmul %16, %17, %cst_13 {dimension_numbers = #tpu.dot_dimension_numbers<[1], [0], [0], [1], [0, 0, 1, 1], [], []>} : vector<256x128xbf16>, vector<128x128xbf16>, vector<256x128xf32> -> vector<256x128xf32>
      %c0_14 = arith.constant 0 : index
      %c0_15 = arith.constant 0 : index
      %19 = vector.load %arg5[%c0_14, %c0_15] : memref<1x128xf32, #tpu.memory_space<vmem>>, vector<1x128xf32>
      %20 = vector.broadcast %19 : vector<1x128xf32> to vector<256x128xf32>
      %21 = arith.addf %18, %20 : vector<256x128xf32>
      %c0_16 = arith.constant 0 : index
      %c0_17 = arith.constant 0 : index
      %22 = vector.load %arg6[%c0_16, %c0_17] : memref<256x128xf32, #tpu.memory_space<vmem>>, vector<256x128xf32>
      tpu.vector_store %arg6[%c0_16, %c0_17], %21 {strides = array<i32>} : memref<256x128xf32, #tpu.memory_space<vmem>>, vector<256x128xf32>,
    } else {
    }
    return
  }
  func.func @transform_0(%arg0: i32, %arg1: i32) -> (i32, i32) {
    %c0_i32 = arith.constant 0 : i32
    return %arg0, %arg1 : i32, i32
  }
  func.func @transform_1(%arg0: i32, %arg1: i32) -> (i32, i32) {
    %c0_i32 = arith.constant 0 : i32
    %c0_i32_0 = arith.constant 0 : i32
    %c0_i32_1 = arith.constant 0 : i32
    return %c0_i32, %c0_i32_0 : i32, i32
  }
  func.func @transform_2(%arg0: i32, %arg1: i32) -> (i32, i32) {
    %c0_i32 = arith.constant 0 : i32
    %c0_i32_0 = arith.constant 0 : i32
    %c0_i32_1 = arith.constant 0 : i32
    return %c0_i32, %c0_i32_0 : i32, i32
  }
  func.func @transform_3(%arg0: i32, %arg1: i32) -> (i32, i32) {
    %c0_i32 = arith.constant 0 : i32
    %c0_i32_0 = arith.constant 0 : i32
    %c0_i32_1 = arith.constant 0 : i32
    return %c0_i32, %c0_i32_0 : i32, i32
  }
  func.func @transform_4(%arg0: i32, %arg1: i32) -> (i32, i32) {
    %c0_i32 = arith.constant 0 : i32
    %c0_i32_0 = arith.constant 0 : i32
    return %arg0, %c0_i32 : i32, i32
  }
}

</mosaic_0001>

<llo_original>
// kernel: gnn_forward.2
$region0: #{gnn_forward.2}
  #allocation0 [shape = 'u32[]', space=smem, size = 0x4, offset = 0x4, fixed_abs, tag = 'smem constant byte address 0x4 - core index']
  #allocation1 [shape = 'u32[72,128]{1,0:T(1,128)}', space=vmem, size = 0x9000, scoped, tag = 'internal scratch']
  #allocation2 [shape = 'f32[256,128]{1,0:T(8,128)}', space=vmem, size = 0x20000, scoped, tag = 'scratch operand']
  %s0 = inlined_call_operand.vmem [shape: bf16[256,256], index: 0, kind: input, shape index: {}]
  %s1 = inlined_call_operand.vmem [shape: bf16[256,128], index: 1, kind: input, shape index: {}]
  %s2 = inlined_call_operand.vmem [shape: bf16[128,128], index: 2, kind: input, shape index: {}]
  %s3 = inlined_call_operand.vmem [shape: f32[1,128], index: 3, kind: input, shape index: {}]
  %s4 = inlined_call_operand.vmem [shape: bf16[256,128], index: 4, kind: output, shape index: {}]
  %s5 = sld [smem:[#allocation0]]
  $region34: #{gnn_forward.2} parent=0
    _
  %s7 = ssub.s32 1, %s5
  %s8 = scalar_select 0, %s7, %s5
  // Predicated region
  $region2: #{gnn_forward.2} parent=0 // pred_check
    _
  $region3: #{gnn_forward.2} parent=0 // pred_check_branch
    %10 = sbr.rel (0) target = $region5
  $region4: #{gnn_forward.2} parent=0 // pred_region
    _
  $region5: #{gnn_forward.2} parent=0 // pred_fallthru
    _
  // Predicated region
  $region6: #{gnn_forward.2} parent=0 // pred_check
    _
  $region7: #{gnn_forward.2} parent=0 // pred_check_branch
    %12 = sbr.rel (0) target = $region9
  $region8: #{gnn_forward.2} parent=0 // pred_region
    _
  $region9: #{gnn_forward.2} parent=0 // pred_fallthru
    _
  // Predicated region
  $region10: #{gnn_forward.2} parent=0 // pred_check
    _
  $region11: #{gnn_forward.2} parent=0 // pred_check_branch
    %14 = sbr.rel (0) target = $region13
  $region12: #{gnn_forward.2} parent=0 // pred_region
    _
  $region13: #{gnn_forward.2} parent=0 // pred_fallthru
    _
  // Predicated region
  $region14: #{gnn_forward.2} parent=0 // pred_check
    _
  $region15: #{gnn_forward.2} parent=0 // pred_check_branch
    %16 = sbr.rel (0) target = $region17
  $region16: #{gnn_forward.2} parent=0 // pred_region
    _
  $region17: #{gnn_forward.2} parent=0 // pred_fallthru
    _
  %p17 = scmp.eq.s32.totalorder 0, 0
  // Predicated region
  $region18: #{gnn_forward.2} parent=0 // pred_check
    %p18 = pneg %p17
  $region19: #{gnn_forward.2} parent=0 // pred_check_branch
    %20 = sbr.rel (%p18) target = $region21
  $region20: #{gnn_forward.2} parent=0 // pred_region
    %21 = vst [vmem:[#allocation2] sm:$0xff] 0.0
    %22 = vst [vmem:[#allocation2 + $0x8] sm:$0xff] 0.0
    %23 = vst [vmem:[#allocation2 + $0x10] sm:$0xff] 0.0
    %24 = vst [vmem:[#allocation2 + $0x18] sm:$0xff] 0.0
    %25 = vst [vmem:[#allocation2 + $0x20] sm:$0xff] 0.0
    %26 = vst [vmem:[#allocation2 + $0x28] sm:$0xff] 0.0
    %27 = vst [vmem:[#allocation2 + $0x30] sm:$0xff] 0.0
    %28 = vst [vmem:[#allocation2 + $0x38] sm:$0xff] 0.0
    %29 = vst [vmem:[#allocation2 + $0x40] sm:$0xff] 0.0
    %30 = vst [vmem:[#allocation2 + $0x48] sm:$0xff] 0.0
    %31 = vst [vmem:[#allocation2 + $0x50] sm:$0xff] 0.0
    %32 = vst [vmem:[#allocation2 + $0x58] sm:$0xff] 0.0
    %33 = vst [vmem:[#allocation2 + $0x60] sm:$0xff] 0.0
    %34 = vst [vmem:[#allocation2 + $0x68] sm:$0xff] 0.0
    %35 = vst [vmem:[#allocation2 + $0x70] sm:$0xff] 0.0
    %36 = vst [vmem:[#allocation2 + $0x78] sm:$0xff] 0.0
    %37 = vst [vmem:[#allocation2 + $0x80] sm:$0xff] 0.0
    %38 = vst [vmem:[#allocation2 + $0x88] sm:$0xff] 0.0
    %39 = vst [vmem:[#allocation2 + $0x90] sm:$0xff] 0.0
    %40 = vst [vmem:[#allocation2 + $0x98] sm:$0xff] 0.0
    %41 = vst [vmem:[#allocation2 + $0xa0] sm:$0xff] 0.0
    %42 = vst [vmem:[#allocation2 + $0xa8] sm:$0xff] 0.0
    %43 = vst [vmem:[#allocation2 + $0xb0] sm:$0xff] 0.0
    %44 = vst [vmem:[#allocation2 + $0xb8] sm:$0xff] 0.0
    %45 = vst [vmem:[#allocation2 + $0xc0] sm:$0xff] 0.0
    %46 = vst [vmem:[#allocation2 + $0xc8] sm:$0xff] 0.0
    %47 = vst [vmem:[#allocation2 + $0xd0] sm:$0xff] 0.0
    %48 = vst [vmem:[#allocation2 + $0xd8] sm:$0xff] 0.0
    %49 = vst [vmem:[#allocation2 + $0xe0] sm:$0xff] 0.0
    %50 = vst [vmem:[#allocation2 + $0xe8] sm:$0xff] 0.0
    %51 = vst [vmem:[#allocation2 + $0xf0] sm:$0xff] 0.0
    %52 = vst [vmem:[#allocation2 + $0xf8] sm:$0xff] 0.0
  $region21: #{gnn_forward.2} parent=0 // pred_fallthru
    _
  %s53 = smul.u32 0, 256
  %s54 = sshra.s32 %s53, 3
  %s55 = sand.u32 %s53, 7
  %s56 = smul.addr %s54, 4
  %s57 = scalar_lea.vmem %s1, %s56
  %v58 = vld [vmem:[%s57] sm:$0xf]
  %v59 = vld [vmem:[%s57 + $0x4] sm:$0xf]
  %v60 = vld [vmem:[%s57 + $0x8] sm:$0xf]
  %v61 = vld [vmem:[%s57 + $0xc] sm:$0xf]
  %v62 = vld [vmem:[%s57 + $0x10] sm:$0xf]
  %v63 = vld [vmem:[%s57 + $0x14] sm:$0xf]
  %v64 = vld [vmem:[%s57 + $0x18] sm:$0xf]
  %v65 = vld [vmem:[%s57 + $0x1c] sm:$0xf]
  %v66 = vld [vmem:[%s57 + $0x20] sm:$0xf]
  %v67 = vld [vmem:[%s57 + $0x24] sm:$0xf]
  %v68 = vld [vmem:[%s57 + $0x28] sm:$0xf]
  %v69 = vld [vmem:[%s57 + $0x2c] sm:$0xf]
  %v70 = vld [vmem:[%s57 + $0x30] sm:$0xf]
  %v71 = vld [vmem:[%s57 + $0x34] sm:$0xf]
  %v72 = vld [vmem:[%s57 + $0x38] sm:$0xf]
  %v73 = vld [vmem:[%s57 + $0x3c] sm:$0xf]
  %v74 = vld [vmem:[%s57 + $0x40] sm:$0xf]
  %v75 = vld [vmem:[%s57 + $0x44] sm:$0xf]
  %v76 = vld [vmem:[%s57 + $0x48] sm:$0xf]
  %v77 = vld [vmem:[%s57 + $0x4c] sm:$0xf]
  %v78 = vld [vmem:[%s57 + $0x50] sm:$0xf]
  %v79 = vld [vmem:[%s57 + $0x54] sm:$0xf]
  %v80 = vld [vmem:[%s57 + $0x58] sm:$0xf]
  %v81 = vld [vmem:[%s57 + $0x5c] sm:$0xf]
  %v82 = vld [vmem:[%s57 + $0x60] sm:$0xf]
  %v83 = vld [vmem:[%s57 + $0x64] sm:$0xf]
  %v84 = vld [vmem:[%s57 + $0x68] sm:$0xf]
  %v85 = vld [vmem:[%s57 + $0x6c] sm:$0xf]
  %v86 = vld [vmem:[%s57 + $0x70] sm:$0xf]
  %v87 = vld [vmem:[%s57 + $0x74] sm:$0xf]
  %v88 = vld [vmem:[%s57 + $0x78] sm:$0xf]
  %v89 = vld [vmem:[%s57 + $0x7c] sm:$0xf]
  %v90 = vld [vmem:[#allocation2] sm:$0xff]
  %v91 = vld [vmem:[#allocation2 + $0x8] sm:$0xff]
  %v92 = vld [vmem:[#allocation2 + $0x10] sm:$0xff]
  %v93 = vld [vmem:[#allocation2 + $0x18] sm:$0xff]
  %v94 = vld [vmem:[#allocation2 + $0x20] sm:$0xff]
  %v95 = vld [vmem:[#allocation2 + $0x28] sm:$0xff]
  %v96 = vld [vmem:[#allocation2 + $0x30] sm:$0xff]
  %v97 = vld [vmem:[#allocation2 + $0x38] sm:$0xff]
  %v98 = vld [vmem:[#allocation2 + $0x40] sm:$0xff]
  %v99 = vld [vmem:[#allocation2 + $0x48] sm:$0xff]
  %v100 = vld [vmem:[#allocation2 + $0x50] sm:$0xff]
  %v101 = vld [vmem:[#allocation2 + $0x58] sm:$0xff]
  %v102 = vld [vmem:[#allocation2 + $0x60] sm:$0xff]
  %v103 = vld [vmem:[#allocation2 + $0x68] sm:$0xff]
  %v104 = vld [vmem:[#allocation2 + $0x70] sm:$0xff]
  %v105 = vld [vmem:[#allocation2 + $0x78] sm:$0xff]
  %v106 = vld [vmem:[#allocation2 + $0x80] sm:$0xff]
  %v107 = vld [vmem:[#allocation2 + $0x88] sm:$0xff]
  %v108 = vld [vmem:[#allocation2 + $0x90] sm:$0xff]
  %v109 = vld [vmem:[#allocation2 + $0x98] sm:$0xff]
  %v110 = vld [vmem:[#allocation2 + $0xa0] sm:$0xff]
  %v111 = vld [vmem:[#allocation2 + $0xa8] sm:$0xff]
  %v112 = vld [vmem:[#allocation2 + $0xb0] sm:$0xff]
  %v113 = vld [vmem:[#allocation2 + $0xb8] sm:$0xff]
  %v114 = vld [vmem:[#allocation2 + $0xc0] sm:$0xff]
  %v115 = vld [vmem:[#allocation2 + $0xc8] sm:$0xff]
  %v116 = vld [vmem:[#allocation2 + $0xd0] sm:$0xff]
  %v117 = vld [vmem:[#allocation2 + $0xd8] sm:$0xff]
  %v118 = vld [vmem:[#allocation2 + $0xe0] sm:$0xff]
  %v119 = vld [vmem:[#allocation2 + $0xe8] sm:$0xff]
  %v120 = vld [vmem:[#allocation2 + $0xf0] sm:$0xff]
  %v121 = vld [vmem:[#allocation2 + $0xf8] sm:$0xff]
  %v122 = vld [vmem:[%s0] sm:$0xff]
  %v123 = vld [vmem:[%s0 + $0x8] sm:$0xff]
  %v124 = vld [vmem:[%s0 + $0x10] sm:$0xff]
  %v125 = vld [vmem:[%s0 + $0x18] sm:$0xff]
  %v126 = vld [vmem:[%s0 + $0x20] sm:$0xff]
  %v127 = vld [vmem:[%s0 + $0x28] sm:$0xff]
  %v128 = vld [vmem:[%s0 + $0x30] sm:$0xff]
  %v129 = vld [vmem:[%s0 + $0x38] sm:$0xff]
  %v130 = vld [vmem:[%s0 + $0x40] sm:$0xff]
  %v131 = vld [vmem:[%s0 + $0x48] sm:$0xff]
  %v132 = vld [vmem:[%s0 + $0x50] sm:$0xff]
  %v133 = vld [vmem:[%s0 + $0x58] sm:$0xff]
  %v134 = vld [vmem:[%s0 + $0x60] sm:$0xff]
  %v135 = vld [vmem:[%s0 + $0x68] sm:$0xff]
  %v136 = vld [vmem:[%s0 + $0x70] sm:$0xff]
  %v137 = vld [vmem:[%s0 + $0x78] sm:$0xff]
  %v138 = vld [vmem:[%s0 + $0x80] sm:$0xff]
  %v139 = vld [vmem:[%s0 + $0x88] sm:$0xff]
  %v140 = vld [vmem:[%s0 + $0x90] sm:$0xff]
  %v141 = vld [vmem:[%s0 + $0x98] sm:$0xff]
  %v142 = vld [vmem:[%s0 + $0xa0] sm:$0xff]
  %v143 = vld [vmem:[%s0 + $0xa8] sm:$0xff]
  %v144 = vld [vmem:[%s0 + $0xb0] sm:$0xff]
  %v145 = vld [vmem:[%s0 + $0xb8] sm:$0xff]
  %v146 = vld [vmem:[%s0 + $0xc0] sm:$0xff]
  %v147 = vld [vmem:[%s0 + $0xc8] sm:$0xff]
  %v148 = vld [vmem:[%s0 + $0xd0] sm:$0xff]
  %v149 = vld [vmem:[%s0 + $0xd8] sm:$0xff]
  %v150 = vld [vmem:[%s0 + $0xe0] sm:$0xff]
  %v151 = vld [vmem:[%s0 + $0xe8] sm:$0xff]
  %v152 = vld [vmem:[%s0 + $0xf0] sm:$0xff]
  %v153 = vld [vmem:[%s0 + $0xf8] sm:$0xff]
  %v186 = vunpack.c.l.b16 %v122
  %v187 = vunpack.c.h.b16 %v122
  %v188 = vunpack.c.l.b16 %v123
  %v189 = vunpack.c.h.b16 %v123
  %v190 = vunpack.c.l.b16 %v124
  %v191 = vunpack.c.h.b16 %v124
  %v192 = vunpack.c.l.b16 %v125
  %v193 = vunpack.c.h.b16 %v125
  %v194 = vunpack.c.l.b16 %v126
  %v195 = vunpack.c.h.b16 %v126
  %v196 = vunpack.c.l.b16 %v127
  %v197 = vunpack.c.h.b16 %v127
  %v198 = vunpack.c.l.b16 %v128
  %v199 = vunpack.c.h.b16 %v128
  %v200 = vunpack.c.l.b16 %v129
  %v201 = vunpack.c.h.b16 %v129
  %v202 = vunpack.c.l.b16 %v130
  %v203 = vunpack.c.h.b16 %v130
  %v204 = vunpack.c.l.b16 %v131
  %v205 = vunpack.c.h.b16 %v131
  %v206 = vunpack.c.l.b16 %v132
  %v207 = vunpack.c.h.b16 %v132
  %v208 = vunpack.c.l.b16 %v133
  %v209 = vunpack.c.h.b16 %v133
  %v210 = vunpack.c.l.b16 %v134
  %v211 = vunpack.c.h.b16 %v134
  %v212 = vunpack.c.l.b16 %v135
  %v213 = vunpack.c.h.b16 %v135
  %v214 = vunpack.c.l.b16 %v136
  %v215 = vunpack.c.h.b16 %v136
  %v216 = vunpack.c.l.b16 %v137
  %v217 = vunpack.c.h.b16 %v137
  %v218 = vunpack.c.l.b16 %v138
  %v219 = vunpack.c.h.b16 %v138
  %v220 = vunpack.c.l.b16 %v139
  %v221 = vunpack.c.h.b16 %v139
  %v222 = vunpack.c.l.b16 %v140
  %v223 = vunpack.c.h.b16 %v140
  %v224 = vunpack.c.l.b16 %v141
  %v225 = vunpack.c.h.b16 %v141
  %v226 = vunpack.c.l.b16 %v142
  %v227 = vunpack.c.h.b16 %v142
  %v228 = vunpack.c.l.b16 %v143
  %v229 = vunpack.c.h.b16 %v143
  %v230 = vunpack.c.l.b16 %v144
  %v231 = vunpack.c.h.b16 %v144
  %v232 = vunpack.c.l.b16 %v145
  %v233 = vunpack.c.h.b16 %v145
  %v234 = vunpack.c.l.b16 %v146
  %v235 = vunpack.c.h.b16 %v146
  %v236 = vunpack.c.l.b16 %v147
  %v237 = vunpack.c.h.b16 %v147
  %v238 = vunpack.c.l.b16 %v148
  %v239 = vunpack.c.h.b16 %v148
  %v240 = vunpack.c.l.b16 %v149
  %v241 = vunpack.c.h.b16 %v149
  %v242 = vunpack.c.l.b16 %v150
  %v243 = vunpack.c.h.b16 %v150
  %v244 = vunpack.c.l.b16 %v151
  %v245 = vunpack.c.h.b16 %v151
  %v246 = vunpack.c.l.b16 %v152
  %v247 = vunpack.c.h.b16 %v152
  %v248 = vunpack.c.l.b16 %v153
  %v249 = vunpack.c.h.b16 %v153
  %v250 = vpack.c.b16 %v188, %v186
  %v251 = vpack.c.b16 %v189, %v187
  %v252 = vpack.c.b16 %v192, %v190
  %v253 = vpack.c.b16 %v193, %v191
  %v254 = vpack.c.b16 %v196, %v194
  %v255 = vpack.c.b16 %v197, %v195
  %v256 = vpack.c.b16 %v200, %v198
  %v257 = vpack.c.b16 %v201, %v199
  %v258 = vpack.c.b16 %v204, %v202
  %v259 = vpack.c.b16 %v205, %v203
  %v260 = vpack.c.b16 %v208, %v206
  %v261 = vpack.c.b16 %v209, %v207
  %v262 = vpack.c.b16 %v212, %v210
  %v263 = vpack.c.b16 %v213, %v211
  %v264 = vpack.c.b16 %v216, %v214
  %v265 = vpack.c.b16 %v217, %v215
  %v266 = vpack.c.b16 %v220, %v218
  %v267 = vpack.c.b16 %v221, %v219
  %v268 = vpack.c.b16 %v224, %v222
  %v269 = vpack.c.b16 %v225, %v223
  %v270 = vpack.c.b16 %v228, %v226
  %v271 = vpack.c.b16 %v229, %v227
  %v272 = vpack.c.b16 %v232, %v230
  %v273 = vpack.c.b16 %v233, %v231
  %v274 = vpack.c.b16 %v236, %v234
  %v275 = vpack.c.b16 %v237, %v235
  %v276 = vpack.c.b16 %v240, %v238
  %v277 = vpack.c.b16 %v241, %v239
  %v278 = vpack.c.b16 %v244, %v242
  %v279 = vpack.c.b16 %v245, %v243
  %v280 = vpack.c.b16 %v248, %v246
  %v281 = vpack.c.b16 %v249, %v247
  %v346 = vunpack.c.l.b16 %v58
  %v347 = vunpack.c.l.b16 %v59
  %v348 = vunpack.c.l.b16 %v60
  %v349 = vunpack.c.l.b16 %v61
  %v350 = vunpack.c.l.b16 %v62
  %v351 = vunpack.c.l.b16 %v63
  %v352 = vunpack.c.l.b16 %v64
  %v353 = vunpack.c.l.b16 %v65
  %v354 = vunpack.c.l.b16 %v66
  %v355 = vunpack.c.l.b16 %v67
  %v356 = vunpack.c.l.b16 %v68
  %v357 = vunpack.c.l.b16 %v69
  %v358 = vunpack.c.l.b16 %v70
  %v359 = vunpack.c.l.b16 %v71
  %v360 = vunpack.c.l.b16 %v72
  %v361 = vunpack.c.l.b16 %v73
  %v362 = vunpack.c.l.b16 %v74
  %v363 = vunpack.c.l.b16 %v75
  %v364 = vunpack.c.l.b16 %v76
  %v365 = vunpack.c.l.b16 %v77
  %v366 = vunpack.c.l.b16 %v78
  %v367 = vunpack.c.l.b16 %v79
  %v368 = vunpack.c.l.b16 %v80
  %v369 = vunpack.c.l.b16 %v81
  %v370 = vunpack.c.l.b16 %v82
  %v371 = vunpack.c.l.b16 %v83
  %v372 = vunpack.c.l.b16 %v84
  %v373 = vunpack.c.l.b16 %v85
  %v374 = vunpack.c.l.b16 %v86
  %v375 = vunpack.c.l.b16 %v87
  %v376 = vunpack.c.l.b16 %v88
  %v377 = vunpack.c.l.b16 %v89
  %v378 = vpack.c.b16 %v347, %v346
  %v379 = vpack.c.b16 %v349, %v348
  %v380 = vpack.c.b16 %v351, %v350
  %v381 = vpack.c.b16 %v353, %v352
  %v382 = vpack.c.b16 %v355, %v354
  %v383 = vpack.c.b16 %v357, %v356
  %v384 = vpack.c.b16 %v359, %v358
  %v385 = vpack.c.b16 %v361, %v360
  %v386 = vpack.c.b16 %v363, %v362
  %v387 = vpack.c.b16 %v365, %v364
  %v388 = vpack.c.b16 %v367, %v366
  %v389 = vpack.c.b16 %v369, %v368
  %v390 = vpack.c.b16 %v371, %v370
  %v391 = vpack.c.b16 %v373, %v372
  %v392 = vpack.c.b16 %v375, %v374
  %v393 = vpack.c.b16 %v377, %v376
  %410 = vmatpush.bf16.msra.mxu0 %v385
  %411 = vmatpush.bf16.msra.mxu0 %v384
  %412 = vmatpush.bf16.msra.mxu0 %v383
  %413 = vmatpush.bf16.msra.mxu0 %v382
  %414 = vmatpush.bf16.msra.mxu0 %v381
  %415 = vmatpush.bf16.msra.mxu0 %v380
  %416 = vmatpush.bf16.msra.mxu0 %v379
  %417 = vmatpush.bf16.msra.mxu0 %v378
  %418 = vmatmul.bf16.gmra.mxu0 %v250
  %v419 = vpop.f32.mrf.mxu0
  %v420 = vadd.f32 0.0, %v419
  %v421 = vpop.f32.mrf.mxu0
  %v422 = vadd.f32 0.0, %v421
  %423 = vmatmul.bf16.gmra.mxu0 %v252
  %v424 = vpop.f32.mrf.mxu0
  %v425 = vadd.f32 0.0, %v424
  %v426 = vpop.f32.mrf.mxu0
  %v427 = vadd.f32 0.0, %v426
  %428 = vmatmul.bf16.gmra.mxu0 %v254
  %v429 = vpop.f32.mrf.mxu0
  %v430 = vadd.f32 0.0, %v429
  %v431 = vpop.f32.mrf.mxu0
  %v432 = vadd.f32 0.0, %v431
  %433 = vmatmul.bf16.gmra.mxu0 %v256
  %v434 = vpop.f32.mrf.mxu0
  %v435 = vadd.f32 0.0, %v434
  %v436 = vpop.f32.mrf.mxu0
  %v437 = vadd.f32 0.0, %v436
  %438 = vmatmul.bf16.gmra.mxu0 %v258
  %v439 = vpop.f32.mrf.mxu0
  %v440 = vadd.f32 0.0, %v439
  %v441 = vpop.f32.mrf.mxu0
  %v442 = vadd.f32 0.0, %v441
  %443 = vmatmul.bf16.gmra.mxu0 %v260
  %v444 = vpop.f32.mrf.mxu0
  %v445 = vadd.f32 0.0, %v444
  %v446 = vpop.f32.mrf.mxu0
  %v447 = vadd.f32 0.0, %v446
  %448 = vmatmul.bf16.gmra.mxu0 %v262
  %v449 = vpop.f32.mrf.mxu0
  %v450 = vadd.f32 0.0, %v449
  %v451 = vpop.f32.mrf.mxu0
  %v452 = vadd.f32 0.0, %v451
  %453 = vmatmul.bf16.gmra.mxu0 %v264
  %v454 = vpop.f32.mrf.mxu0
  %v455 = vadd.f32 0.0, %v454
  %v456 = vpop.f32.mrf.mxu0
  %v457 = vadd.f32 0.0, %v456
  %458 = vmatmul.bf16.gmra.mxu0 %v266
  %v459 = vpop.f32.mrf.mxu0
  %v460 = vadd.f32 0.0, %v459
  %v461 = vpop.f32.mrf.mxu0
  %v462 = vadd.f32 0.0, %v461
  %463 = vmatmul.bf16.gmra.mxu0 %v268
  %v464 = vpop.f32.mrf.mxu0
  %v465 = vadd.f32 0.0, %v464
  %v466 = vpop.f32.mrf.mxu0
  %v467 = vadd.f32 0.0, %v466
  %468 = vmatmul.bf16.gmra.mxu0 %v270
  %v469 = vpop.f32.mrf.mxu0
  %v470 = vadd.f32 0.0, %v469
  %v471 = vpop.f32.mrf.mxu0
  %v472 = vadd.f32 0.0, %v471
  %473 = vmatmul.bf16.gmra.mxu0 %v272
  %v474 = vpop.f32.mrf.mxu0
  %v475 = vadd.f32 0.0, %v474
  %v476 = vpop.f32.mrf.mxu0
  %v477 = vadd.f32 0.0, %v476
  %478 = vmatmul.bf16.gmra.mxu0 %v274
  %v479 = vpop.f32.mrf.mxu0
  %v480 = vadd.f32 0.0, %v479
  %v481 = vpop.f32.mrf.mxu0
  %v482 = vadd.f32 0.0, %v481
  %483 = vmatmul.bf16.gmra.mxu0 %v276
  %v484 = vpop.f32.mrf.mxu0
  %v485 = vadd.f32 0.0, %v484
  %v486 = vpop.f32.mrf.mxu0
  %v487 = vadd.f32 0.0, %v486
  %488 = vmatmul.bf16.gmra.mxu0 %v278
  %v489 = vpop.f32.mrf.mxu0
  %v490 = vadd.f32 0.0, %v489
  %v491 = vpop.f32.mrf.mxu0
  %v492 = vadd.f32 0.0, %v491
  %493 = vmatmul.bf16.gmra.mxu0 %v280
  %v494 = vpop.f32.mrf.mxu0
  %v495 = vadd.f32 0.0, %v494
  %v496 = vpop.f32.mrf.mxu0
  %v497 = vadd.f32 0.0, %v496
  %498 = vdwg.mxu0
  %499 = vmatpush.bf16.msra.mxu0 %v393
  %500 = vmatpush.bf16.msra.mxu0 %v392
  %501 = vmatpush.bf16.msra.mxu0 %v391
  %502 = vmatpush.bf16.msra.mxu0 %v390
  %503 = vmatpush.bf16.msra.mxu0 %v389
  %504 = vmatpush.bf16.msra.mxu0 %v388
  %505 = vmatpush.bf16.msra.mxu0 %v387
  %506 = vmatpush.bf16.msra.mxu0 %v386
  %507 = vmatmul.bf16.gmra.mxu0 %v251
  %v508 = vpop.f32.mrf.mxu0
  %v509 = vadd.f32 %v420, %v508
  %v510 = vpop.f32.mrf.mxu0
  %v511 = vadd.f32 %v422, %v510
  %512 = vmatmul.bf16.gmra.mxu0 %v253
  %v513 = vpop.f32.mrf.mxu0
  %v514 = vadd.f32 %v425, %v513
  %v515 = vpop.f32.mrf.mxu0
  %v516 = vadd.f32 %v427, %v515
  %517 = vmatmul.bf16.gmra.mxu0 %v255
  %v518 = vpop.f32.mrf.mxu0
  %v519 = vadd.f32 %v430, %v518
  %v520 = vpop.f32.mrf.mxu0
  %v521 = vadd.f32 %v432, %v520
  %522 = vmatmul.bf16.gmra.mxu0 %v257
  %v523 = vpop.f32.mrf.mxu0
  %v524 = vadd.f32 %v435, %v523
  %v525 = vpop.f32.mrf.mxu0
  %v526 = vadd.f32 %v437, %v525
  %527 = vmatmul.bf16.gmra.mxu0 %v259
  %v528 = vpop.f32.mrf.mxu0
  %v529 = vadd.f32 %v440, %v528
  %v530 = vpop.f32.mrf.mxu0
  %v531 = vadd.f32 %v442, %v530
  %532 = vmatmul.bf16.gmra.mxu0 %v261
  %v533 = vpop.f32.mrf.mxu0
  %v534 = vadd.f32 %v445, %v533
  %v535 = vpop.f32.mrf.mxu0
  %v536 = vadd.f32 %v447, %v535
  %537 = vmatmul.bf16.gmra.mxu0 %v263
  %v538 = vpop.f32.mrf.mxu0
  %v539 = vadd.f32 %v450, %v538
  %v540 = vpop.f32.mrf.mxu0
  %v541 = vadd.f32 %v452, %v540
  %542 = vmatmul.bf16.gmra.mxu0 %v265
  %v543 = vpop.f32.mrf.mxu0
  %v544 = vadd.f32 %v455, %v543
  %v545 = vpop.f32.mrf.mxu0
  %v546 = vadd.f32 %v457, %v545
  %547 = vmatmul.bf16.gmra.mxu0 %v267
  %v548 = vpop.f32.mrf.mxu0
  %v549 = vadd.f32 %v460, %v548
  %v550 = vpop.f32.mrf.mxu0
  %v551 = vadd.f32 %v462, %v550
  %552 = vmatmul.bf16.gmra.mxu0 %v269
  %v553 = vpop.f32.mrf.mxu0
  %v554 = vadd.f32 %v465, %v553
  %v555 = vpop.f32.mrf.mxu0
  %v556 = vadd.f32 %v467, %v555
  %557 = vmatmul.bf16.gmra.mxu0 %v271
  %v558 = vpop.f32.mrf.mxu0
  %v559 = vadd.f32 %v470, %v558
  %v560 = vpop.f32.mrf.mxu0
  %v561 = vadd.f32 %v472, %v560
  %562 = vmatmul.bf16.gmra.mxu0 %v273
  %v563 = vpop.f32.mrf.mxu0
  %v564 = vadd.f32 %v475, %v563
  %v565 = vpop.f32.mrf.mxu0
  %v566 = vadd.f32 %v477, %v565
  %567 = vmatmul.bf16.gmra.mxu0 %v275
  %v568 = vpop.f32.mrf.mxu0
  %v569 = vadd.f32 %v480, %v568
  %v570 = vpop.f32.mrf.mxu0
  %v571 = vadd.f32 %v482, %v570
  %572 = vmatmul.bf16.gmra.mxu0 %v277
  %v573 = vpop.f32.mrf.mxu0
  %v574 = vadd.f32 %v485, %v573
  %v575 = vpop.f32.mrf.mxu0
  %v576 = vadd.f32 %v487, %v575
  %577 = vmatmul.bf16.gmra.mxu0 %v279
  %v578 = vpop.f32.mrf.mxu0
  %v579 = vadd.f32 %v490, %v578
  %v580 = vpop.f32.mrf.mxu0
  %v581 = vadd.f32 %v492, %v580
  %582 = vmatmul.bf16.gmra.mxu0 %v281
  %v583 = vpop.f32.mrf.mxu0
  %v584 = vadd.f32 %v495, %v583
  %v585 = vpop.f32.mrf.mxu0
  %v586 = vadd.f32 %v497, %v585
  %587 = vdwg.mxu0
  %v588 = vadd.f32 %v90, %v509
  %v589 = vadd.f32 %v91, %v511
  %v590 = vadd.f32 %v92, %v514
  %v591 = vadd.f32 %v93, %v516
  %v592 = vadd.f32 %v94, %v519
  %v593 = vadd.f32 %v95, %v521
  %v594 = vadd.f32 %v96, %v524
  %v595 = vadd.f32 %v97, %v526
  %v596 = vadd.f32 %v98, %v529
  %v597 = vadd.f32 %v99, %v531
  %v598 = vadd.f32 %v100, %v534
  %v599 = vadd.f32 %v101, %v536
  %v600 = vadd.f32 %v102, %v539
  %v601 = vadd.f32 %v103, %v541
  %v602 = vadd.f32 %v104, %v544
  %v603 = vadd.f32 %v105, %v546
  %v604 = vadd.f32 %v106, %v549
  %v605 = vadd.f32 %v107, %v551
  %v606 = vadd.f32 %v108, %v554
  %v607 = vadd.f32 %v109, %v556
  %v608 = vadd.f32 %v110, %v559
  %v609 = vadd.f32 %v111, %v561
  %v610 = vadd.f32 %v112, %v564
  %v611 = vadd.f32 %v113, %v566
  %v612 = vadd.f32 %v114, %v569
  %v613 = vadd.f32 %v115, %v571
  %v614 = vadd.f32 %v116, %v574
  %v615 = vadd.f32 %v117, %v576
  %v616 = vadd.f32 %v118, %v579
  %v617 = vadd.f32 %v119, %v581
  %v618 = vadd.f32 %v120, %v584
  %v619 = vadd.f32 %v121, %v586
  %620 = vst [vmem:[#allocation2] sm:$0xff] %v588
  %621 = vst [vmem:[#allocation2 + $0x8] sm:$0xff] %v589
  %622 = vst [vmem:[#allocation2 + $0x10] sm:$0xff] %v590
  %623 = vst [vmem:[#allocation2 + $0x18] sm:$0xff] %v591
  %624 = vst [vmem:[#allocation2 + $0x20] sm:$0xff] %v592
  %625 = vst [vmem:[#allocation2 + $0x28] sm:$0xff] %v593
  %626 = vst [vmem:[#allocation2 + $0x30] sm:$0xff] %v594
  %627 = vst [vmem:[#allocation2 + $0x38] sm:$0xff] %v595
  %628 = vst [vmem:[#allocation2 + $0x40] sm:$0xff] %v596
  %629 = vst [vmem:[#allocation2 + $0x48] sm:$0xff] %v597
  %630 = vst [vmem:[#allocation2 + $0x50] sm:$0xff] %v598
  %631 = vst [vmem:[#allocation2 + $0x58] sm:$0xff] %v599
  %632 = vst [vmem:[#allocation2 + $0x60] sm:$0xff] %v600
  %633 = vst [vmem:[#allocation2 + $0x68] sm:$0xff] %v601
  %634 = vst [vmem:[#allocation2 + $0x70] sm:$0xff] %v602
  %635 = vst [vmem:[#allocation2 + $0x78] sm:$0xff] %v603
  %636 = vst [vmem:[#allocation2 + $0x80] sm:$0xff] %v604
  %637 = vst [vmem:[#allocation2 + $0x88] sm:$0xff] %v605
  %638 = vst [vmem:[#allocation2 + $0x90] sm:$0xff] %v606
  %639 = vst [vmem:[#allocation2 + $0x98] sm:$0xff] %v607
  %640 = vst [vmem:[#allocation2 + $0xa0] sm:$0xff] %v608
  %641 = vst [vmem:[#allocation2 + $0xa8] sm:$0xff] %v609
  %642 = vst [vmem:[#allocation2 + $0xb0] sm:$0xff] %v610
  %643 = vst [vmem:[#allocation2 + $0xb8] sm:$0xff] %v611
  %644 = vst [vmem:[#allocation2 + $0xc0] sm:$0xff] %v612
  %645 = vst [vmem:[#allocation2 + $0xc8] sm:$0xff] %v613
  %646 = vst [vmem:[#allocation2 + $0xd0] sm:$0xff] %v614
  %647 = vst [vmem:[#allocation2 + $0xd8] sm:$0xff] %v615
  %648 = vst [vmem:[#allocation2 + $0xe0] sm:$0xff] %v616
  %649 = vst [vmem:[#allocation2 + $0xe8] sm:$0xff] %v617
  %650 = vst [vmem:[#allocation2 + $0xf0] sm:$0xff] %v618
  %651 = vst [vmem:[#allocation2 + $0xf8] sm:$0xff] %v619
  // Predicated region
  $region22: #{gnn_forward.2} parent=0 // pred_check
    %p652 = pneg %p17
  $region23: #{gnn_forward.2} parent=0 // pred_check_branch
    %654 = sbr.rel (%p652) target = $region25
  $region24: #{gnn_forward.2} parent=0 // pred_region
    %v655 = vld [vmem:[#allocation2] sm:$0xff]
    %v656 = vld [vmem:[#allocation2 + $0x8] sm:$0xff]
    %v657 = vld [vmem:[#allocation2 + $0x10] sm:$0xff]
    %v658 = vld [vmem:[#allocation2 + $0x18] sm:$0xff]
    %v659 = vld [vmem:[#allocation2 + $0x20] sm:$0xff]
    %v660 = vld [vmem:[#allocation2 + $0x28] sm:$0xff]
    %v661 = vld [vmem:[#allocation2 + $0x30] sm:$0xff]
    %v662 = vld [vmem:[#allocation2 + $0x38] sm:$0xff]
    %v663 = vld [vmem:[#allocation2 + $0x40] sm:$0xff]
    %v664 = vld [vmem:[#allocation2 + $0x48] sm:$0xff]
    %v665 = vld [vmem:[#allocation2 + $0x50] sm:$0xff]
    %v666 = vld [vmem:[#allocation2 + $0x58] sm:$0xff]
    %v667 = vld [vmem:[#allocation2 + $0x60] sm:$0xff]
    %v668 = vld [vmem:[#allocation2 + $0x68] sm:$0xff]
    %v669 = vld [vmem:[#allocation2 + $0x70] sm:$0xff]
    %v670 = vld [vmem:[#allocation2 + $0x78] sm:$0xff]
    %v671 = vld [vmem:[#allocation2 + $0x80] sm:$0xff]
    %v672 = vld [vmem:[#allocation2 + $0x88] sm:$0xff]
    %v673 = vld [vmem:[#allocation2 + $0x90] sm:$0xff]
    %v674 = vld [vmem:[#allocation2 + $0x98] sm:$0xff]
    %v675 = vld [vmem:[#allocation2 + $0xa0] sm:$0xff]
    %v676 = vld [vmem:[#allocation2 + $0xa8] sm:$0xff]
    %v677 = vld [vmem:[#allocation2 + $0xb0] sm:$0xff]
    %v678 = vld [vmem:[#allocation2 + $0xb8] sm:$0xff]
    %v679 = vld [vmem:[#allocation2 + $0xc0] sm:$0xff]
    %v680 = vld [vmem:[#allocation2 + $0xc8] sm:$0xff]
    %v681 = vld [vmem:[#allocation2 + $0xd0] sm:$0xff]
    %v682 = vld [vmem:[#allocation2 + $0xd8] sm:$0xff]
    %v683 = vld [vmem:[#allocation2 + $0xe0] sm:$0xff]
    %v684 = vld [vmem:[#allocation2 + $0xe8] sm:$0xff]
    %v685 = vld [vmem:[#allocation2 + $0xf0] sm:$0xff]
    %v686 = vld [vmem:[#allocation2 + $0xf8] sm:$0xff]
    %v687 = vpack.c.bf16 %v656, %v655
    %v688 = vpack.c.bf16 %v658, %v657
    %v689 = vpack.c.bf16 %v660, %v659
    %v690 = vpack.c.bf16 %v662, %v661
    %v691 = vpack.c.bf16 %v664, %v663
    %v692 = vpack.c.bf16 %v666, %v665
    %v693 = vpack.c.bf16 %v668, %v667
    %v694 = vpack.c.bf16 %v670, %v669
    %v695 = vpack.c.bf16 %v672, %v671
    %v696 = vpack.c.bf16 %v674, %v673
    %v697 = vpack.c.bf16 %v676, %v675
    %v698 = vpack.c.bf16 %v678, %v677
    %v699 = vpack.c.bf16 %v680, %v679
    %v700 = vpack.c.bf16 %v682, %v681
    %v701 = vpack.c.bf16 %v684, %v683
    %v702 = vpack.c.bf16 %v686, %v685
    %v703 = vld [vmem:[%s2] sm:$0xf]
    %v704 = vld [vmem:[%s2 + $0x4] sm:$0xf]
    %v705 = vld [vmem:[%s2 + $0x8] sm:$0xf]
    %v706 = vld [vmem:[%s2 + $0xc] sm:$0xf]
    %v707 = vld [vmem:[%s2 + $0x10] sm:$0xf]
    %v708 = vld [vmem:[%s2 + $0x14] sm:$0xf]
    %v709 = vld [vmem:[%s2 + $0x18] sm:$0xf]
    %v710 = vld [vmem:[%s2 + $0x1c] sm:$0xf]
    %v711 = vld [vmem:[%s2 + $0x20] sm:$0xf]
    %v712 = vld [vmem:[%s2 + $0x24] sm:$0xf]
    %v713 = vld [vmem:[%s2 + $0x28] sm:$0xf]
    %v714 = vld [vmem:[%s2 + $0x2c] sm:$0xf]
    %v715 = vld [vmem:[%s2 + $0x30] sm:$0xf]
    %v716 = vld [vmem:[%s2 + $0x34] sm:$0xf]
    %v717 = vld [vmem:[%s2 + $0x38] sm:$0xf]
    %v718 = vld [vmem:[%s2 + $0x3c] sm:$0xf]
    %v719 = vld [vmem:[%s3] sm:$0x1]
    %v721 = vperm.slane %v719, 0
    %v739 = vunpack.c.l.b16 %v703
    %v740 = vunpack.c.l.b16 %v704
    %v741 = vunpack.c.l.b16 %v705
    %v742 = vunpack.c.l.b16 %v706
    %v743 = vunpack.c.l.b16 %v707
    %v744 = vunpack.c.l.b16 %v708
    %v745 = vunpack.c.l.b16 %v709
    %v746 = vunpack.c.l.b16 %v710
    %v747 = vunpack.c.l.b16 %v711
    %v748 = vunpack.c.l.b16 %v712
    %v749 = vunpack.c.l.b16 %v713
    %v750 = vunpack.c.l.b16 %v714
    %v751 = vunpack.c.l.b16 %v715
    %v752 = vunpack.c.l.b16 %v716
    %v753 = vunpack.c.l.b16 %v717
    %v754 = vunpack.c.l.b16 %v718
    %v755 = vpack.c.b16 %v740, %v739
    %v756 = vpack.c.b16 %v742, %v741
    %v757 = vpack.c.b16 %v744, %v743
    %v758 = vpack.c.b16 %v746, %v745
    %v759 = vpack.c.b16 %v748, %v747
    %v760 = vpack.c.b16 %v750, %v749
    %v761 = vpack.c.b16 %v752, %v751
    %v762 = vpack.c.b16 %v754, %v753
    %771 = vmatpush.bf16.msra.mxu0 %v762
    %772 = vmatpush.bf16.msra.mxu0 %v761
    %773 = vmatpush.bf16.msra.mxu0 %v760
    %774 = vmatpush.bf16.msra.mxu0 %v759
    %775 = vmatpush.bf16.msra.mxu0 %v758
    %776 = vmatpush.bf16.msra.mxu0 %v757
    %777 = vmatpush.bf16.msra.mxu0 %v756
    %778 = vmatpush.bf16.msra.mxu0 %v755
    %779 = vmatmul.bf16.gmra.mxu0 %v687
    %v780 = vpop.f32.mrf.mxu0
    %v781 = vadd.f32 %v721, %v780
    %v782 = vpop.f32.mrf.mxu0
    %v783 = vadd.f32 %v721, %v782
    %784 = vmatmul.bf16.gmra.mxu0 %v688
    %v785 = vpop.f32.mrf.mxu0
    %v786 = vadd.f32 %v721, %v785
    %v787 = vpop.f32.mrf.mxu0
    %v788 = vadd.f32 %v721, %v787
    %789 = vmatmul.bf16.gmra.mxu0 %v689
    %v790 = vpop.f32.mrf.mxu0
    %v791 = vadd.f32 %v721, %v790
    %v792 = vpop.f32.mrf.mxu0
    %v793 = vadd.f32 %v721, %v792
    %794 = vmatmul.bf16.gmra.mxu0 %v690
    %v795 = vpop.f32.mrf.mxu0
    %v796 = vadd.f32 %v721, %v795
    %v797 = vpop.f32.mrf.mxu0
    %v798 = vadd.f32 %v721, %v797
    %799 = vmatmul.bf16.gmra.mxu0 %v691
    %v800 = vpop.f32.mrf.mxu0
    %v801 = vadd.f32 %v721, %v800
    %v802 = vpop.f32.mrf.mxu0
    %v803 = vadd.f32 %v721, %v802
    %804 = vmatmul.bf16.gmra.mxu0 %v692
    %v805 = vpop.f32.mrf.mxu0
    %v806 = vadd.f32 %v721, %v805
    %v807 = vpop.f32.mrf.mxu0
    %v808 = vadd.f32 %v721, %v807
    %809 = vmatmul.bf16.gmra.mxu0 %v693
    %v810 = vpop.f32.mrf.mxu0
    %v811 = vadd.f32 %v721, %v810
    %v812 = vpop.f32.mrf.mxu0
    %v813 = vadd.f32 %v721, %v812
    %814 = vmatmul.bf16.gmra.mxu0 %v694
    %v815 = vpop.f32.mrf.mxu0
    %v816 = vadd.f32 %v721, %v815
    %v817 = vpop.f32.mrf.mxu0
    %v818 = vadd.f32 %v721, %v817
    %819 = vmatmul.bf16.gmra.mxu0 %v695
    %v820 = vpop.f32.mrf.mxu0
    %v821 = vadd.f32 %v721, %v820
    %v822 = vpop.f32.mrf.mxu0
    %v823 = vadd.f32 %v721, %v822
    %824 = vmatmul.bf16.gmra.mxu0 %v696
    %v825 = vpop.f32.mrf.mxu0
    %v826 = vadd.f32 %v721, %v825
    %v827 = vpop.f32.mrf.mxu0
    %v828 = vadd.f32 %v721, %v827
    %829 = vmatmul.bf16.gmra.mxu0 %v697
    %v830 = vpop.f32.mrf.mxu0
    %v831 = vadd.f32 %v721, %v830
    %v832 = vpop.f32.mrf.mxu0
    %v833 = vadd.f32 %v721, %v832
    %834 = vmatmul.bf16.gmra.mxu0 %v698
    %v835 = vpop.f32.mrf.mxu0
    %v836 = vadd.f32 %v721, %v835
    %v837 = vpop.f32.mrf.mxu0
    %v838 = vadd.f32 %v721, %v837
    %839 = vmatmul.bf16.gmra.mxu0 %v699
    %v840 = vpop.f32.mrf.mxu0
    %v841 = vadd.f32 %v721, %v840
    %v842 = vpop.f32.mrf.mxu0
    %v843 = vadd.f32 %v721, %v842
    %844 = vmatmul.bf16.gmra.mxu0 %v700
    %v845 = vpop.f32.mrf.mxu0
    %v846 = vadd.f32 %v721, %v845
    %v847 = vpop.f32.mrf.mxu0
    %v848 = vadd.f32 %v721, %v847
    %849 = vmatmul.bf16.gmra.mxu0 %v701
    %v850 = vpop.f32.mrf.mxu0
    %v851 = vadd.f32 %v721, %v850
    %v852 = vpop.f32.mrf.mxu0
    %v853 = vadd.f32 %v721, %v852
    %854 = vmatmul.bf16.gmra.mxu0 %v702
    %v855 = vpop.f32.mrf.mxu0
    %v856 = vadd.f32 %v721, %v855
    %v857 = vpop.f32.mrf.mxu0
    %v858 = vadd.f32 %v721, %v857
    %859 = vdwg.mxu0
    %v860 = vmax.f32 %v781, 0.0
    %v861 = vmax.f32 %v783, 0.0
    %v862 = vmax.f32 %v786, 0.0
    %v863 = vmax.f32 %v788, 0.0
    %v864 = vmax.f32 %v791, 0.0
    %v865 = vmax.f32 %v793, 0.0
    %v866 = vmax.f32 %v796, 0.0
    %v867 = vmax.f32 %v798, 0.0
    %v868 = vmax.f32 %v801, 0.0
    %v869 = vmax.f32 %v803, 0.0
    %v870 = vmax.f32 %v806, 0.0
    %v871 = vmax.f32 %v808, 0.0
    %v872 = vmax.f32 %v811, 0.0
    %v873 = vmax.f32 %v813, 0.0
    %v874 = vmax.f32 %v816, 0.0
    %v875 = vmax.f32 %v818, 0.0
    %v876 = vmax.f32 %v821, 0.0
    %v877 = vmax.f32 %v823, 0.0
    %v878 = vmax.f32 %v826, 0.0
    %v879 = vmax.f32 %v828, 0.0
    %v880 = vmax.f32 %v831, 0.0
    %v881 = vmax.f32 %v833, 0.0
    %v882 = vmax.f32 %v836, 0.0
    %v883 = vmax.f32 %v838, 0.0
    %v884 = vmax.f32 %v841, 0.0
    %v885 = vmax.f32 %v843, 0.0
    %v886 = vmax.f32 %v846, 0.0
    %v887 = vmax.f32 %v848, 0.0
    %v888 = vmax.f32 %v851, 0.0
    %v889 = vmax.f32 %v853, 0.0
    %v890 = vmax.f32 %v856, 0.0
    %v891 = vmax.f32 %v858, 0.0
    %v892 = vpack.c.bf16 %v860, %v860
    %v893 = vpack.c.bf16 %v861, %v861
    %v894 = vpack.c.bf16 %v862, %v862
    %v895 = vpack.c.bf16 %v863, %v863
    %v896 = vpack.c.bf16 %v864, %v864
    %v897 = vpack.c.bf16 %v865, %v865
    %v898 = vpack.c.bf16 %v866, %v866
    %v899 = vpack.c.bf16 %v867, %v867
    %v900 = vpack.c.bf16 %v868, %v868
    %v901 = vpack.c.bf16 %v869, %v869
    %v902 = vpack.c.bf16 %v870, %v870
    %v903 = vpack.c.bf16 %v871, %v871
    %v904 = vpack.c.bf16 %v872, %v872
    %v905 = vpack.c.bf16 %v873, %v873
    %v906 = vpack.c.bf16 %v874, %v874
    %v907 = vpack.c.bf16 %v875, %v875
    %v908 = vpack.c.bf16 %v876, %v876
    %v909 = vpack.c.bf16 %v877, %v877
    %v910 = vpack.c.bf16 %v878, %v878
    %v911 = vpack.c.bf16 %v879, %v879
    %v912 = vpack.c.bf16 %v880, %v880
    %v913 = vpack.c.bf16 %v881, %v881
    %v914 = vpack.c.bf16 %v882, %v882
    %v915 = vpack.c.bf16 %v883, %v883
    %v916 = vpack.c.bf16 %v884, %v884
    %v917 = vpack.c.bf16 %v885, %v885
    %v918 = vpack.c.bf16 %v886, %v886
    %v919 = vpack.c.bf16 %v887, %v887
    %v920 = vpack.c.bf16 %v888, %v888
    %v921 = vpack.c.bf16 %v889, %v889
    %v922 = vpack.c.bf16 %v890, %v890
    %v923 = vpack.c.bf16 %v891, %v891
    %924 = vst [vmem:[%s4] sm:$0xf] %v892
    %925 = vst [vmem:[%s4 + $0x4] sm:$0xf] %v893
    %926 = vst [vmem:[%s4 + $0x8] sm:$0xf] %v894
    %927 = vst [vmem:[%s4 + $0xc] sm:$0xf] %v895
    %928 = vst [vmem:[%s4 + $0x10] sm:$0xf] %v896
    %929 = vst [vmem:[%s4 + $0x14] sm:$0xf] %v897
    %930 = vst [vmem:[%s4 + $0x18] sm:$0xf] %v898
    %931 = vst [vmem:[%s4 + $0x1c] sm:$0xf] %v899
    %932 = vst [vmem:[%s4 + $0x20] sm:$0xf] %v900
    %933 = vst [vmem:[%s4 + $0x24] sm:$0xf] %v901
    %934 = vst [vmem:[%s4 + $0x28] sm:$0xf] %v902
    %935 = vst [vmem:[%s4 + $0x2c] sm:$0xf] %v903
    %936 = vst [vmem:[%s4 + $0x30] sm:$0xf] %v904
    %937 = vst [vmem:[%s4 + $0x34] sm:$0xf] %v905
    %938 = vst [vmem:[%s4 + $0x38] sm:$0xf] %v906
    %939 = vst [vmem:[%s4 + $0x3c] sm:$0xf] %v907
    %940 = vst [vmem:[%s4 + $0x40] sm:$0xf] %v908
    %941 = vst [vmem:[%s4 + $0x44] sm:$0xf] %v909
    %942 = vst [vmem:[%s4 + $0x48] sm:$0xf] %v910
    %943 = vst [vmem:[%s4 + $0x4c] sm:$0xf] %v911
    %944 = vst [vmem:[%s4 + $0x50] sm:$0xf] %v912
    %945 = vst [vmem:[%s4 + $0x54] sm:$0xf] %v913
    %946 = vst [vmem:[%s4 + $0x58] sm:$0xf] %v914
    %947 = vst [vmem:[%s4 + $0x5c] sm:$0xf] %v915
    %948 = vst [vmem:[%s4 + $0x60] sm:$0xf] %v916
    %949 = vst [vmem:[%s4 + $0x64] sm:$0xf] %v917
    %950 = vst [vmem:[%s4 + $0x68] sm:$0xf] %v918
    %951 = vst [vmem:[%s4 + $0x6c] sm:$0xf] %v919
    %952 = vst [vmem:[%s4 + $0x70] sm:$0xf] %v920
    %953 = vst [vmem:[%s4 + $0x74] sm:$0xf] %v921
    %954 = vst [vmem:[%s4 + $0x78] sm:$0xf] %v922
    %955 = vst [vmem:[%s4 + $0x7c] sm:$0xf] %v923
  $region25: #{gnn_forward.2} parent=0 // pred_fallthru
    _
  // Predicated region
  $region26: #{gnn_forward.2} parent=0 // pred_check
    _
  $region27: #{gnn_forward.2} parent=0 // pred_check_branch
    %957 = sbr.rel (0) target = $region29
  $region28: #{gnn_forward.2} parent=0 // pred_region
    _
  $region29: #{gnn_forward.2} parent=0 // pred_fallthru
    _
  // Predicated region
  $region30: #{gnn_forward.2} parent=0 // pred_check
    _
  $region31: #{gnn_forward.2} parent=0 // pred_check_branch
    %959 = sbr.rel (0) target = $region33
  $region32: #{gnn_forward.2} parent=0 // pred_region
    _
  $region33: #{gnn_forward.2} parent=0 // pred_fallthru
    _

// kernel: gnn_forward.3
$region0: #{gnn_forward.3}
  #allocation0 [shape = 'u32[]', space=smem, size = 0x4, offset = 0x4, fixed_abs, tag = 'smem constant byte address 0x4 - core index']
  #allocation1 [shape = 'u32[72,128]{1,0:T(1,128)}', space=vmem, size = 0x9000, scoped, tag = 'internal scratch']
  #allocation2 [shape = 'f32[256,128]{1,0:T(8,128)}', space=vmem, size = 0x20000, scoped, tag = 'scratch operand']
  %s0 = inlined_call_operand.vmem [shape: bf16[256,256], index: 0, kind: input, shape index: {}]
  %s1 = inlined_call_operand.vmem [shape: bf16[256,128], index: 1, kind: input, shape index: {}]
  %s2 = inlined_call_operand.vmem [shape: bf16[128,128], index: 2, kind: input, shape index: {}]
  %s3 = inlined_call_operand.vmem [shape: f32[1,128], index: 3, kind: input, shape index: {}]
  %s4 = inlined_call_operand.vmem [shape: f32[256,128], index: 4, kind: output, shape index: {}]
  %s5 = sld [smem:[#allocation0]]
  $region34: #{gnn_forward.3} parent=0
    _
  %s7 = ssub.s32 1, %s5
  %s8 = scalar_select 0, %s7, %s5
  // Predicated region
  $region2: #{gnn_forward.3} parent=0 // pred_check
    _
  $region3: #{gnn_forward.3} parent=0 // pred_check_branch
    %10 = sbr.rel (0) target = $region5
  $region4: #{gnn_forward.3} parent=0 // pred_region
    _
  $region5: #{gnn_forward.3} parent=0 // pred_fallthru
    _
  // Predicated region
  $region6: #{gnn_forward.3} parent=0 // pred_check
    _
  $region7: #{gnn_forward.3} parent=0 // pred_check_branch
    %12 = sbr.rel (0) target = $region9
  $region8: #{gnn_forward.3} parent=0 // pred_region
    _
  $region9: #{gnn_forward.3} parent=0 // pred_fallthru
    _
  // Predicated region
  $region10: #{gnn_forward.3} parent=0 // pred_check
    _
  $region11: #{gnn_forward.3} parent=0 // pred_check_branch
    %14 = sbr.rel (0) target = $region13
  $region12: #{gnn_forward.3} parent=0 // pred_region
    _
  $region13: #{gnn_forward.3} parent=0 // pred_fallthru
    _
  // Predicated region
  $region14: #{gnn_forward.3} parent=0 // pred_check
    _
  $region15: #{gnn_forward.3} parent=0 // pred_check_branch
    %16 = sbr.rel (0) target = $region17
  $region16: #{gnn_forward.3} parent=0 // pred_region
    _
  $region17: #{gnn_forward.3} parent=0 // pred_fallthru
    _
  %p17 = scmp.eq.s32.totalorder 0, 0
  // Predicated region
  $region18: #{gnn_forward.3} parent=0 // pred_check
    %p18 = pneg %p17
  $region19: #{gnn_forward.3} parent=0 // pred_check_branch
    %20 = sbr.rel (%p18) target = $region21
  $region20: #{gnn_forward.3} parent=0 // pred_region
    %21 = vst [vmem:[#allocation2] sm:$0xff] 0.0
    %22 = vst [vmem:[#allocation2 + $0x8] sm:$0xff] 0.0
    %23 = vst [vmem:[#allocation2 + $0x10] sm:$0xff] 0.0
    %24 = vst [vmem:[#allocation2 + $0x18] sm:$0xff] 0.0
    %25 = vst [vmem:[#allocation2 + $0x20] sm:$0xff] 0.0
    %26 = vst [vmem:[#allocation2 + $0x28] sm:$0xff] 0.0
    %27 = vst [vmem:[#allocation2 + $0x30] sm:$0xff] 0.0
    %28 = vst [vmem:[#allocation2 + $0x38] sm:$0xff] 0.0
    %29 = vst [vmem:[#allocation2 + $0x40] sm:$0xff] 0.0
    %30 = vst [vmem:[#allocation2 + $0x48] sm:$0xff] 0.0
    %31 = vst [vmem:[#allocation2 + $0x50] sm:$0xff] 0.0
    %32 = vst [vmem:[#allocation2 + $0x58] sm:$0xff] 0.0
    %33 = vst [vmem:[#allocation2 + $0x60] sm:$0xff] 0.0
    %34 = vst [vmem:[#allocation2 + $0x68] sm:$0xff] 0.0
    %35 = vst [vmem:[#allocation2 + $0x70] sm:$0xff] 0.0
    %36 = vst [vmem:[#allocation2 + $0x78] sm:$0xff] 0.0
    %37 = vst [vmem:[#allocation2 + $0x80] sm:$0xff] 0.0
    %38 = vst [vmem:[#allocation2 + $0x88] sm:$0xff] 0.0
    %39 = vst [vmem:[#allocation2 + $0x90] sm:$0xff] 0.0
    %40 = vst [vmem:[#allocation2 + $0x98] sm:$0xff] 0.0
    %41 = vst [vmem:[#allocation2 + $0xa0] sm:$0xff] 0.0
    %42 = vst [vmem:[#allocation2 + $0xa8] sm:$0xff] 0.0
    %43 = vst [vmem:[#allocation2 + $0xb0] sm:$0xff] 0.0
    %44 = vst [vmem:[#allocation2 + $0xb8] sm:$0xff] 0.0
    %45 = vst [vmem:[#allocation2 + $0xc0] sm:$0xff] 0.0
    %46 = vst [vmem:[#allocation2 + $0xc8] sm:$0xff] 0.0
    %47 = vst [vmem:[#allocation2 + $0xd0] sm:$0xff] 0.0
    %48 = vst [vmem:[#allocation2 + $0xd8] sm:$0xff] 0.0
    %49 = vst [vmem:[#allocation2 + $0xe0] sm:$0xff] 0.0
    %50 = vst [vmem:[#allocation2 + $0xe8] sm:$0xff] 0.0
    %51 = vst [vmem:[#allocation2 + $0xf0] sm:$0xff] 0.0
    %52 = vst [vmem:[#allocation2 + $0xf8] sm:$0xff] 0.0
  $region21: #{gnn_forward.3} parent=0 // pred_fallthru
    _
  %s53 = smul.u32 0, 256
  %s54 = sshra.s32 %s53, 3
  %s55 = sand.u32 %s53, 7
  %s56 = smul.addr %s54, 4
  %s57 = scalar_lea.vmem %s1, %s56
  %v58 = vld [vmem:[%s57] sm:$0xf]
  %v59 = vld [vmem:[%s57 + $0x4] sm:$0xf]
  %v60 = vld [vmem:[%s57 + $0x8] sm:$0xf]
  %v61 = vld [vmem:[%s57 + $0xc] sm:$0xf]
  %v62 = vld [vmem:[%s57 + $0x10] sm:$0xf]
  %v63 = vld [vmem:[%s57 + $0x14] sm:$0xf]
  %v64 = vld [vmem:[%s57 + $0x18] sm:$0xf]
  %v65 = vld [vmem:[%s57 + $0x1c] sm:$0xf]
  %v66 = vld [vmem:[%s57 + $0x20] sm:$0xf]
  %v67 = vld [vmem:[%s57 + $0x24] sm:$0xf]
  %v68 = vld [vmem:[%s57 + $0x28] sm:$0xf]
  %v69 = vld [vmem:[%s57 + $0x2c] sm:$0xf]
  %v70 = vld [vmem:[%s57 + $0x30] sm:$0xf]
  %v71 = vld [vmem:[%s57 + $0x34] sm:$0xf]
  %v72 = vld [vmem:[%s57 + $0x38] sm:$0xf]
  %v73 = vld [vmem:[%s57 + $0x3c] sm:$0xf]
  %v74 = vld [vmem:[%s57 + $0x40] sm:$0xf]
  %v75 = vld [vmem:[%s57 + $0x44] sm:$0xf]
  %v76 = vld [vmem:[%s57 + $0x48] sm:$0xf]
  %v77 = vld [vmem:[%s57 + $0x4c] sm:$0xf]
  %v78 = vld [vmem:[%s57 + $0x50] sm:$0xf]
  %v79 = vld [vmem:[%s57 + $0x54] sm:$0xf]
  %v80 = vld [vmem:[%s57 + $0x58] sm:$0xf]
  %v81 = vld [vmem:[%s57 + $0x5c] sm:$0xf]
  %v82 = vld [vmem:[%s57 + $0x60] sm:$0xf]
  %v83 = vld [vmem:[%s57 + $0x64] sm:$0xf]
  %v84 = vld [vmem:[%s57 + $0x68] sm:$0xf]
  %v85 = vld [vmem:[%s57 + $0x6c] sm:$0xf]
  %v86 = vld [vmem:[%s57 + $0x70] sm:$0xf]
  %v87 = vld [vmem:[%s57 + $0x74] sm:$0xf]
  %v88 = vld [vmem:[%s57 + $0x78] sm:$0xf]
  %v89 = vld [vmem:[%s57 + $0x7c] sm:$0xf]
  %v90 = vld [vmem:[#allocation2] sm:$0xff]
  %v91 = vld [vmem:[#allocation2 + $0x8] sm:$0xff]
  %v92 = vld [vmem:[#allocation2 + $0x10] sm:$0xff]
  %v93 = vld [vmem:[#allocation2 + $0x18] sm:$0xff]
  %v94 = vld [vmem:[#allocation2 + $0x20] sm:$0xff]
  %v95 = vld [vmem:[#allocation2 + $0x28] sm:$0xff]
  %v96 = vld [vmem:[#allocation2 + $0x30] sm:$0xff]
  %v97 = vld [vmem:[#allocation2 + $0x38] sm:$0xff]
  %v98 = vld [vmem:[#allocation2 + $0x40] sm:$0xff]
  %v99 = vld [vmem:[#allocation2 + $0x48] sm:$0xff]
  %v100 = vld [vmem:[#allocation2 + $0x50] sm:$0xff]
  %v101 = vld [vmem:[#allocation2 + $0x58] sm:$0xff]
  %v102 = vld [vmem:[#allocation2 + $0x60] sm:$0xff]
  %v103 = vld [vmem:[#allocation2 + $0x68] sm:$0xff]
  %v104 = vld [vmem:[#allocation2 + $0x70] sm:$0xff]
  %v105 = vld [vmem:[#allocation2 + $0x78] sm:$0xff]
  %v106 = vld [vmem:[#allocation2 + $0x80] sm:$0xff]
  %v107 = vld [vmem:[#allocation2 + $0x88] sm:$0xff]
  %v108 = vld [vmem:[#allocation2 + $0x90] sm:$0xff]
  %v109 = vld [vmem:[#allocation2 + $0x98] sm:$0xff]
  %v110 = vld [vmem:[#allocation2 + $0xa0] sm:$0xff]
  %v111 = vld [vmem:[#allocation2 + $0xa8] sm:$0xff]
  %v112 = vld [vmem:[#allocation2 + $0xb0] sm:$0xff]
  %v113 = vld [vmem:[#allocation2 + $0xb8] sm:$0xff]
  %v114 = vld [vmem:[#allocation2 + $0xc0] sm:$0xff]
  %v115 = vld [vmem:[#allocation2 + $0xc8] sm:$0xff]
  %v116 = vld [vmem:[#allocation2 + $0xd0] sm:$0xff]
  %v117 = vld [vmem:[#allocation2 + $0xd8] sm:$0xff]
  %v118 = vld [vmem:[#allocation2 + $0xe0] sm:$0xff]
  %v119 = vld [vmem:[#allocation2 + $0xe8] sm:$0xff]
  %v120 = vld [vmem:[#allocation2 + $0xf0] sm:$0xff]
  %v121 = vld [vmem:[#allocation2 + $0xf8] sm:$0xff]
  %v122 = vld [vmem:[%s0] sm:$0xff]
  %v123 = vld [vmem:[%s0 + $0x8] sm:$0xff]
  %v124 = vld [vmem:[%s0 + $0x10] sm:$0xff]
  %v125 = vld [vmem:[%s0 + $0x18] sm:$0xff]
  %v126 = vld [vmem:[%s0 + $0x20] sm:$0xff]
  %v127 = vld [vmem:[%s0 + $0x28] sm:$0xff]
  %v128 = vld [vmem:[%s0 + $0x30] sm:$0xff]
  %v129 = vld [vmem:[%s0 + $0x38] sm:$0xff]
  %v130 = vld [vmem:[%s0 + $0x40] sm:$0xff]
  %v131 = vld [vmem:[%s0 + $0x48] sm:$0xff]
  %v132 = vld [vmem:[%s0 + $0x50] sm:$0xff]
  %v133 = vld [vmem:[%s0 + $0x58] sm:$0xff]
  %v134 = vld [vmem:[%s0 + $0x60] sm:$0xff]
  %v135 = vld [vmem:[%s0 + $0x68] sm:$0xff]
  %v136 = vld [vmem:[%s0 + $0x70] sm:$0xff]
  %v137 = vld [vmem:[%s0 + $0x78] sm:$0xff]
  %v138 = vld [vmem:[%s0 + $0x80] sm:$0xff]
  %v139 = vld [vmem:[%s0 + $0x88] sm:$0xff]
  %v140 = vld [vmem:[%s0 + $0x90] sm:$0xff]
  %v141 = vld [vmem:[%s0 + $0x98] sm:$0xff]
  %v142 = vld [vmem:[%s0 + $0xa0] sm:$0xff]
  %v143 = vld [vmem:[%s0 + $0xa8] sm:$0xff]
  %v144 = vld [vmem:[%s0 + $0xb0] sm:$0xff]
  %v145 = vld [vmem:[%s0 + $0xb8] sm:$0xff]
  %v146 = vld [vmem:[%s0 + $0xc0] sm:$0xff]
  %v147 = vld [vmem:[%s0 + $0xc8] sm:$0xff]
  %v148 = vld [vmem:[%s0 + $0xd0] sm:$0xff]
  %v149 = vld [vmem:[%s0 + $0xd8] sm:$0xff]
  %v150 = vld [vmem:[%s0 + $0xe0] sm:$0xff]
  %v151 = vld [vmem:[%s0 + $0xe8] sm:$0xff]
  %v152 = vld [vmem:[%s0 + $0xf0] sm:$0xff]
  %v153 = vld [vmem:[%s0 + $0xf8] sm:$0xff]
  %v186 = vunpack.c.l.b16 %v122
  %v187 = vunpack.c.h.b16 %v122
  %v188 = vunpack.c.l.b16 %v123
  %v189 = vunpack.c.h.b16 %v123
  %v190 = vunpack.c.l.b16 %v124
  %v191 = vunpack.c.h.b16 %v124
  %v192 = vunpack.c.l.b16 %v125
  %v193 = vunpack.c.h.b16 %v125
  %v194 = vunpack.c.l.b16 %v126
  %v195 = vunpack.c.h.b16 %v126
  %v196 = vunpack.c.l.b16 %v127
  %v197 = vunpack.c.h.b16 %v127
  %v198 = vunpack.c.l.b16 %v128
  %v199 = vunpack.c.h.b16 %v128
  %v200 = vunpack.c.l.b16 %v129
  %v201 = vunpack.c.h.b16 %v129
  %v202 = vunpack.c.l.b16 %v130
  %v203 = vunpack.c.h.b16 %v130
  %v204 = vunpack.c.l.b16 %v131
  %v205 = vunpack.c.h.b16 %v131
  %v206 = vunpack.c.l.b16 %v132
  %v207 = vunpack.c.h.b16 %v132
  %v208 = vunpack.c.l.b16 %v133
  %v209 = vunpack.c.h.b16 %v133
  %v210 = vunpack.c.l.b16 %v134
  %v211 = vunpack.c.h.b16 %v134
  %v212 = vunpack.c.l.b16 %v135
  %v213 = vunpack.c.h.b16 %v135
  %v214 = vunpack.c.l.b16 %v136
  %v215 = vunpack.c.h.b16 %v136
  %v216 = vunpack.c.l.b16 %v137
  %v217 = vunpack.c.h.b16 %v137
  %v218 = vunpack.c.l.b16 %v138
  %v219 = vunpack.c.h.b16 %v138
  %v220 = vunpack.c.l.b16 %v139
  %v221 = vunpack.c.h.b16 %v139
  %v222 = vunpack.c.l.b16 %v140
  %v223 = vunpack.c.h.b16 %v140
  %v224 = vunpack.c.l.b16 %v141
  %v225 = vunpack.c.h.b16 %v141
  %v226 = vunpack.c.l.b16 %v142
  %v227 = vunpack.c.h.b16 %v142
  %v228 = vunpack.c.l.b16 %v143
  %v229 = vunpack.c.h.b16 %v143
  %v230 = vunpack.c.l.b16 %v144
  %v231 = vunpack.c.h.b16 %v144
  %v232 = vunpack.c.l.b16 %v145
  %v233 = vunpack.c.h.b16 %v145
  %v234 = vunpack.c.l.b16 %v146
  %v235 = vunpack.c.h.b16 %v146
  %v236 = vunpack.c.l.b16 %v147
  %v237 = vunpack.c.h.b16 %v147
  %v238 = vunpack.c.l.b16 %v148
  %v239 = vunpack.c.h.b16 %v148
  %v240 = vunpack.c.l.b16 %v149
  %v241 = vunpack.c.h.b16 %v149
  %v242 = vunpack.c.l.b16 %v150
  %v243 = vunpack.c.h.b16 %v150
  %v244 = vunpack.c.l.b16 %v151
  %v245 = vunpack.c.h.b16 %v151
  %v246 = vunpack.c.l.b16 %v152
  %v247 = vunpack.c.h.b16 %v152
  %v248 = vunpack.c.l.b16 %v153
  %v249 = vunpack.c.h.b16 %v153
  %v250 = vpack.c.b16 %v188, %v186
  %v251 = vpack.c.b16 %v189, %v187
  %v252 = vpack.c.b16 %v192, %v190
  %v253 = vpack.c.b16 %v193, %v191
  %v254 = vpack.c.b16 %v196, %v194
  %v255 = vpack.c.b16 %v197, %v195
  %v256 = vpack.c.b16 %v200, %v198
  %v257 = vpack.c.b16 %v201, %v199
  %v258 = vpack.c.b16 %v204, %v202
  %v259 = vpack.c.b16 %v205, %v203
  %v260 = vpack.c.b16 %v208, %v206
  %v261 = vpack.c.b16 %v209, %v207
  %v262 = vpack.c.b16 %v212, %v210
  %v263 = vpack.c.b16 %v213, %v211
  %v264 = vpack.c.b16 %v216, %v214
  %v265 = vpack.c.b16 %v217, %v215
  %v266 = vpack.c.b16 %v220, %v218
  %v267 = vpack.c.b16 %v221, %v219
  %v268 = vpack.c.b16 %v224, %v222
  %v269 = vpack.c.b16 %v225, %v223
  %v270 = vpack.c.b16 %v228, %v226
  %v271 = vpack.c.b16 %v229, %v227
  %v272 = vpack.c.b16 %v232, %v230
  %v273 = vpack.c.b16 %v233, %v231
  %v274 = vpack.c.b16 %v236, %v234
  %v275 = vpack.c.b16 %v237, %v235
  %v276 = vpack.c.b16 %v240, %v238
  %v277 = vpack.c.b16 %v241, %v239
  %v278 = vpack.c.b16 %v244, %v242
  %v279 = vpack.c.b16 %v245, %v243
  %v280 = vpack.c.b16 %v248, %v246
  %v281 = vpack.c.b16 %v249, %v247
  %v346 = vunpack.c.l.b16 %v58
  %v347 = vunpack.c.l.b16 %v59
  %v348 = vunpack.c.l.b16 %v60
  %v349 = vunpack.c.l.b16 %v61
  %v350 = vunpack.c.l.b16 %v62
  %v351 = vunpack.c.l.b16 %v63
  %v352 = vunpack.c.l.b16 %v64
  %v353 = vunpack.c.l.b16 %v65
  %v354 = vunpack.c.l.b16 %v66
  %v355 = vunpack.c.l.b16 %v67
  %v356 = vunpack.c.l.b16 %v68
  %v357 = vunpack.c.l.b16 %v69
  %v358 = vunpack.c.l.b16 %v70
  %v359 = vunpack.c.l.b16 %v71
  %v360 = vunpack.c.l.b16 %v72
  %v361 = vunpack.c.l.b16 %v73
  %v362 = vunpack.c.l.b16 %v74
  %v363 = vunpack.c.l.b16 %v75
  %v364 = vunpack.c.l.b16 %v76
  %v365 = vunpack.c.l.b16 %v77
  %v366 = vunpack.c.l.b16 %v78
  %v367 = vunpack.c.l.b16 %v79
  %v368 = vunpack.c.l.b16 %v80
  %v369 = vunpack.c.l.b16 %v81
  %v370 = vunpack.c.l.b16 %v82
  %v371 = vunpack.c.l.b16 %v83
  %v372 = vunpack.c.l.b16 %v84
  %v373 = vunpack.c.l.b16 %v85
  %v374 = vunpack.c.l.b16 %v86
  %v375 = vunpack.c.l.b16 %v87
  %v376 = vunpack.c.l.b16 %v88
  %v377 = vunpack.c.l.b16 %v89
  %v378 = vpack.c.b16 %v347, %v346
  %v379 = vpack.c.b16 %v349, %v348
  %v380 = vpack.c.b16 %v351, %v350
  %v381 = vpack.c.b16 %v353, %v352
  %v382 = vpack.c.b16 %v355, %v354
  %v383 = vpack.c.b16 %v357, %v356
  %v384 = vpack.c.b16 %v359, %v358
  %v385 = vpack.c.b16 %v361, %v360
  %v386 = vpack.c.b16 %v363, %v362
  %v387 = vpack.c.b16 %v365, %v364
  %v388 = vpack.c.b16 %v367, %v366
  %v389 = vpack.c.b16 %v369, %v368
  %v390 = vpack.c.b16 %v371, %v370
  %v391 = vpack.c.b16 %v373, %v372
  %v392 = vpack.c.b16 %v375, %v374
  %v393 = vpack.c.b16 %v377, %v376
  %410 = vmatpush.bf16.msra.mxu0 %v385
  %411 = vmatpush.bf16.msra.mxu0 %v384
  %412 = vmatpush.bf16.msra.mxu0 %v383
  %413 = vmatpush.bf16.msra.mxu0 %v382
  %414 = vmatpush.bf16.msra.mxu0 %v381
  %415 = vmatpush.bf16.msra.mxu0 %v380
  %416 = vmatpush.bf16.msra.mxu0 %v379
  %417 = vmatpush.bf16.msra.mxu0 %v378
  %418 = vmatmul.bf16.gmra.mxu0 %v250
  %v419 = vpop.f32.mrf.mxu0
  %v420 = vadd.f32 0.0, %v419
  %v421 = vpop.f32.mrf.mxu0
  %v422 = vadd.f32 0.0, %v421
  %423 = vmatmul.bf16.gmra.mxu0 %v252
  %v424 = vpop.f32.mrf.mxu0
  %v425 = vadd.f32 0.0, %v424
  %v426 = vpop.f32.mrf.mxu0
  %v427 = vadd.f32 0.0, %v426
  %428 = vmatmul.bf16.gmra.mxu0 %v254
  %v429 = vpop.f32.mrf.mxu0
  %v430 = vadd.f32 0.0, %v429
  %v431 = vpop.f32.mrf.mxu0
  %v432 = vadd.f32 0.0, %v431
  %433 = vmatmul.bf16.gmra.mxu0 %v256
  %v434 = vpop.f32.mrf.mxu0
  %v435 = vadd.f32 0.0, %v434
  %v436 = vpop.f32.mrf.mxu0
  %v437 = vadd.f32 0.0, %v436
  %438 = vmatmul.bf16.gmra.mxu0 %v258
  %v439 = vpop.f32.mrf.mxu0
  %v440 = vadd.f32 0.0, %v439
  %v441 = vpop.f32.mrf.mxu0
  %v442 = vadd.f32 0.0, %v441
  %443 = vmatmul.bf16.gmra.mxu0 %v260
  %v444 = vpop.f32.mrf.mxu0
  %v445 = vadd.f32 0.0, %v444
  %v446 = vpop.f32.mrf.mxu0
  %v447 = vadd.f32 0.0, %v446
  %448 = vmatmul.bf16.gmra.mxu0 %v262
  %v449 = vpop.f32.mrf.mxu0
  %v450 = vadd.f32 0.0, %v449
  %v451 = vpop.f32.mrf.mxu0
  %v452 = vadd.f32 0.0, %v451
  %453 = vmatmul.bf16.gmra.mxu0 %v264
  %v454 = vpop.f32.mrf.mxu0
  %v455 = vadd.f32 0.0, %v454
  %v456 = vpop.f32.mrf.mxu0
  %v457 = vadd.f32 0.0, %v456
  %458 = vmatmul.bf16.gmra.mxu0 %v266
  %v459 = vpop.f32.mrf.mxu0
  %v460 = vadd.f32 0.0, %v459
  %v461 = vpop.f32.mrf.mxu0
  %v462 = vadd.f32 0.0, %v461
  %463 = vmatmul.bf16.gmra.mxu0 %v268
  %v464 = vpop.f32.mrf.mxu0
  %v465 = vadd.f32 0.0, %v464
  %v466 = vpop.f32.mrf.mxu0
  %v467 = vadd.f32 0.0, %v466
  %468 = vmatmul.bf16.gmra.mxu0 %v270
  %v469 = vpop.f32.mrf.mxu0
  %v470 = vadd.f32 0.0, %v469
  %v471 = vpop.f32.mrf.mxu0
  %v472 = vadd.f32 0.0, %v471
  %473 = vmatmul.bf16.gmra.mxu0 %v272
  %v474 = vpop.f32.mrf.mxu0
  %v475 = vadd.f32 0.0, %v474
  %v476 = vpop.f32.mrf.mxu0
  %v477 = vadd.f32 0.0, %v476
  %478 = vmatmul.bf16.gmra.mxu0 %v274
  %v479 = vpop.f32.mrf.mxu0
  %v480 = vadd.f32 0.0, %v479
  %v481 = vpop.f32.mrf.mxu0
  %v482 = vadd.f32 0.0, %v481
  %483 = vmatmul.bf16.gmra.mxu0 %v276
  %v484 = vpop.f32.mrf.mxu0
  %v485 = vadd.f32 0.0, %v484
  %v486 = vpop.f32.mrf.mxu0
  %v487 = vadd.f32 0.0, %v486
  %488 = vmatmul.bf16.gmra.mxu0 %v278
  %v489 = vpop.f32.mrf.mxu0
  %v490 = vadd.f32 0.0, %v489
  %v491 = vpop.f32.mrf.mxu0
  %v492 = vadd.f32 0.0, %v491
  %493 = vmatmul.bf16.gmra.mxu0 %v280
  %v494 = vpop.f32.mrf.mxu0
  %v495 = vadd.f32 0.0, %v494
  %v496 = vpop.f32.mrf.mxu0
  %v497 = vadd.f32 0.0, %v496
  %498 = vdwg.mxu0
  %499 = vmatpush.bf16.msra.mxu0 %v393
  %500 = vmatpush.bf16.msra.mxu0 %v392
  %501 = vmatpush.bf16.msra.mxu0 %v391
  %502 = vmatpush.bf16.msra.mxu0 %v390
  %503 = vmatpush.bf16.msra.mxu0 %v389
  %504 = vmatpush.bf16.msra.mxu0 %v388
  %505 = vmatpush.bf16.msra.mxu0 %v387
  %506 = vmatpush.bf16.msra.mxu0 %v386
  %507 = vmatmul.bf16.gmra.mxu0 %v251
  %v508 = vpop.f32.mrf.mxu0
  %v509 = vadd.f32 %v420, %v508
  %v510 = vpop.f32.mrf.mxu0
  %v511 = vadd.f32 %v422, %v510
  %512 = vmatmul.bf16.gmra.mxu0 %v253
  %v513 = vpop.f32.mrf.mxu0
  %v514 = vadd.f32 %v425, %v513
  %v515 = vpop.f32.mrf.mxu0
  %v516 = vadd.f32 %v427, %v515
  %517 = vmatmul.bf16.gmra.mxu0 %v255
  %v518 = vpop.f32.mrf.mxu0
  %v519 = vadd.f32 %v430, %v518
  %v520 = vpop.f32.mrf.mxu0
  %v521 = vadd.f32 %v432, %v520
  %522 = vmatmul.bf16.gmra.mxu0 %v257
  %v523 = vpop.f32.mrf.mxu0
  %v524 = vadd.f32 %v435, %v523
  %v525 = vpop.f32.mrf.mxu0
  %v526 = vadd.f32 %v437, %v525
  %527 = vmatmul.bf16.gmra.mxu0 %v259
  %v528 = vpop.f32.mrf.mxu0
  %v529 = vadd.f32 %v440, %v528
  %v530 = vpop.f32.mrf.mxu0
  %v531 = vadd.f32 %v442, %v530
  %532 = vmatmul.bf16.gmra.mxu0 %v261
  %v533 = vpop.f32.mrf.mxu0
  %v534 = vadd.f32 %v445, %v533
  %v535 = vpop.f32.mrf.mxu0
  %v536 = vadd.f32 %v447, %v535
  %537 = vmatmul.bf16.gmra.mxu0 %v263
  %v538 = vpop.f32.mrf.mxu0
  %v539 = vadd.f32 %v450, %v538
  %v540 = vpop.f32.mrf.mxu0
  %v541 = vadd.f32 %v452, %v540
  %542 = vmatmul.bf16.gmra.mxu0 %v265
  %v543 = vpop.f32.mrf.mxu0
  %v544 = vadd.f32 %v455, %v543
  %v545 = vpop.f32.mrf.mxu0
  %v546 = vadd.f32 %v457, %v545
  %547 = vmatmul.bf16.gmra.mxu0 %v267
  %v548 = vpop.f32.mrf.mxu0
  %v549 = vadd.f32 %v460, %v548
  %v550 = vpop.f32.mrf.mxu0
  %v551 = vadd.f32 %v462, %v550
  %552 = vmatmul.bf16.gmra.mxu0 %v269
  %v553 = vpop.f32.mrf.mxu0
  %v554 = vadd.f32 %v465, %v553
  %v555 = vpop.f32.mrf.mxu0
  %v556 = vadd.f32 %v467, %v555
  %557 = vmatmul.bf16.gmra.mxu0 %v271
  %v558 = vpop.f32.mrf.mxu0
  %v559 = vadd.f32 %v470, %v558
  %v560 = vpop.f32.mrf.mxu0
  %v561 = vadd.f32 %v472, %v560
  %562 = vmatmul.bf16.gmra.mxu0 %v273
  %v563 = vpop.f32.mrf.mxu0
  %v564 = vadd.f32 %v475, %v563
  %v565 = vpop.f32.mrf.mxu0
  %v566 = vadd.f32 %v477, %v565
  %567 = vmatmul.bf16.gmra.mxu0 %v275
  %v568 = vpop.f32.mrf.mxu0
  %v569 = vadd.f32 %v480, %v568
  %v570 = vpop.f32.mrf.mxu0
  %v571 = vadd.f32 %v482, %v570
  %572 = vmatmul.bf16.gmra.mxu0 %v277
  %v573 = vpop.f32.mrf.mxu0
  %v574 = vadd.f32 %v485, %v573
  %v575 = vpop.f32.mrf.mxu0
  %v576 = vadd.f32 %v487, %v575
  %577 = vmatmul.bf16.gmra.mxu0 %v279
  %v578 = vpop.f32.mrf.mxu0
  %v579 = vadd.f32 %v490, %v578
  %v580 = vpop.f32.mrf.mxu0
  %v581 = vadd.f32 %v492, %v580
  %582 = vmatmul.bf16.gmra.mxu0 %v281
  %v583 = vpop.f32.mrf.mxu0
  %v584 = vadd.f32 %v495, %v583
  %v585 = vpop.f32.mrf.mxu0
  %v586 = vadd.f32 %v497, %v585
  %587 = vdwg.mxu0
  %v588 = vadd.f32 %v90, %v509
  %v589 = vadd.f32 %v91, %v511
  %v590 = vadd.f32 %v92, %v514
  %v591 = vadd.f32 %v93, %v516
  %v592 = vadd.f32 %v94, %v519
  %v593 = vadd.f32 %v95, %v521
  %v594 = vadd.f32 %v96, %v524
  %v595 = vadd.f32 %v97, %v526
  %v596 = vadd.f32 %v98, %v529
  %v597 = vadd.f32 %v99, %v531
  %v598 = vadd.f32 %v100, %v534
  %v599 = vadd.f32 %v101, %v536
  %v600 = vadd.f32 %v102, %v539
  %v601 = vadd.f32 %v103, %v541
  %v602 = vadd.f32 %v104, %v544
  %v603 = vadd.f32 %v105, %v546
  %v604 = vadd.f32 %v106, %v549
  %v605 = vadd.f32 %v107, %v551
  %v606 = vadd.f32 %v108, %v554
  %v607 = vadd.f32 %v109, %v556
  %v608 = vadd.f32 %v110, %v559
  %v609 = vadd.f32 %v111, %v561
  %v610 = vadd.f32 %v112, %v564
  %v611 = vadd.f32 %v113, %v566
  %v612 = vadd.f32 %v114, %v569
  %v613 = vadd.f32 %v115, %v571
  %v614 = vadd.f32 %v116, %v574
  %v615 = vadd.f32 %v117, %v576
  %v616 = vadd.f32 %v118, %v579
  %v617 = vadd.f32 %v119, %v581
  %v618 = vadd.f32 %v120, %v584
  %v619 = vadd.f32 %v121, %v586
  %620 = vst [vmem:[#allocation2] sm:$0xff] %v588
  %621 = vst [vmem:[#allocation2 + $0x8] sm:$0xff] %v589
  %622 = vst [vmem:[#allocation2 + $0x10] sm:$0xff] %v590
  %623 = vst [vmem:[#allocation2 + $0x18] sm:$0xff] %v591
  %624 = vst [vmem:[#allocation2 + $0x20] sm:$0xff] %v592
  %625 = vst [vmem:[#allocation2 + $0x28] sm:$0xff] %v593
  %626 = vst [vmem:[#allocation2 + $0x30] sm:$0xff] %v594
  %627 = vst [vmem:[#allocation2 + $0x38] sm:$0xff] %v595
  %628 = vst [vmem:[#allocation2 + $0x40] sm:$0xff] %v596
  %629 = vst [vmem:[#allocation2 + $0x48] sm:$0xff] %v597
  %630 = vst [vmem:[#allocation2 + $0x50] sm:$0xff] %v598
  %631 = vst [vmem:[#allocation2 + $0x58] sm:$0xff] %v599
  %632 = vst [vmem:[#allocation2 + $0x60] sm:$0xff] %v600
  %633 = vst [vmem:[#allocation2 + $0x68] sm:$0xff] %v601
  %634 = vst [vmem:[#allocation2 + $0x70] sm:$0xff] %v602
  %635 = vst [vmem:[#allocation2 + $0x78] sm:$0xff] %v603
  %636 = vst [vmem:[#allocation2 + $0x80] sm:$0xff] %v604
  %637 = vst [vmem:[#allocation2 + $0x88] sm:$0xff] %v605
  %638 = vst [vmem:[#allocation2 + $0x90] sm:$0xff] %v606
  %639 = vst [vmem:[#allocation2 + $0x98] sm:$0xff] %v607
  %640 = vst [vmem:[#allocation2 + $0xa0] sm:$0xff] %v608
  %641 = vst [vmem:[#allocation2 + $0xa8] sm:$0xff] %v609
  %642 = vst [vmem:[#allocation2 + $0xb0] sm:$0xff] %v610
  %643 = vst [vmem:[#allocation2 + $0xb8] sm:$0xff] %v611
  %644 = vst [vmem:[#allocation2 + $0xc0] sm:$0xff] %v612
  %645 = vst [vmem:[#allocation2 + $0xc8] sm:$0xff] %v613
  %646 = vst [vmem:[#allocation2 + $0xd0] sm:$0xff] %v614
  %647 = vst [vmem:[#allocation2 + $0xd8] sm:$0xff] %v615
  %648 = vst [vmem:[#allocation2 + $0xe0] sm:$0xff] %v616
  %649 = vst [vmem:[#allocation2 + $0xe8] sm:$0xff] %v617
  %650 = vst [vmem:[#allocation2 + $0xf0] sm:$0xff] %v618
  %651 = vst [vmem:[#allocation2 + $0xf8] sm:$0xff] %v619
  // Predicated region
  $region22: #{gnn_forward.3} parent=0 // pred_check
    %p652 = pneg %p17
  $region23: #{gnn_forward.3} parent=0 // pred_check_branch
    %654 = sbr.rel (%p652) target = $region25
  $region24: #{gnn_forward.3} parent=0 // pred_region
    %v655 = vld [vmem:[#allocation2] sm:$0xff]
    %v656 = vld [vmem:[#allocation2 + $0x8] sm:$0xff]
    %v657 = vld [vmem:[#allocation2 + $0x10] sm:$0xff]
    %v658 = vld [vmem:[#allocation2 + $0x18] sm:$0xff]
    %v659 = vld [vmem:[#allocation2 + $0x20] sm:$0xff]
    %v660 = vld [vmem:[#allocation2 + $0x28] sm:$0xff]
    %v661 = vld [vmem:[#allocation2 + $0x30] sm:$0xff]
    %v662 = vld [vmem:[#allocation2 + $0x38] sm:$0xff]
    %v663 = vld [vmem:[#allocation2 + $0x40] sm:$0xff]
    %v664 = vld [vmem:[#allocation2 + $0x48] sm:$0xff]
    %v665 = vld [vmem:[#allocation2 + $0x50] sm:$0xff]
    %v666 = vld [vmem:[#allocation2 + $0x58] sm:$0xff]
    %v667 = vld [vmem:[#allocation2 + $0x60] sm:$0xff]
    %v668 = vld [vmem:[#allocation2 + $0x68] sm:$0xff]
    %v669 = vld [vmem:[#allocation2 + $0x70] sm:$0xff]
    %v670 = vld [vmem:[#allocation2 + $0x78] sm:$0xff]
    %v671 = vld [vmem:[#allocation2 + $0x80] sm:$0xff]
    %v672 = vld [vmem:[#allocation2 + $0x88] sm:$0xff]
    %v673 = vld [vmem:[#allocation2 + $0x90] sm:$0xff]
    %v674 = vld [vmem:[#allocation2 + $0x98] sm:$0xff]
    %v675 = vld [vmem:[#allocation2 + $0xa0] sm:$0xff]
    %v676 = vld [vmem:[#allocation2 + $0xa8] sm:$0xff]
    %v677 = vld [vmem:[#allocation2 + $0xb0] sm:$0xff]
    %v678 = vld [vmem:[#allocation2 + $0xb8] sm:$0xff]
    %v679 = vld [vmem:[#allocation2 + $0xc0] sm:$0xff]
    %v680 = vld [vmem:[#allocation2 + $0xc8] sm:$0xff]
    %v681 = vld [vmem:[#allocation2 + $0xd0] sm:$0xff]
    %v682 = vld [vmem:[#allocation2 + $0xd8] sm:$0xff]
    %v683 = vld [vmem:[#allocation2 + $0xe0] sm:$0xff]
    %v684 = vld [vmem:[#allocation2 + $0xe8] sm:$0xff]
    %v685 = vld [vmem:[#allocation2 + $0xf0] sm:$0xff]
    %v686 = vld [vmem:[#allocation2 + $0xf8] sm:$0xff]
    %v687 = vpack.c.bf16 %v656, %v655
    %v688 = vpack.c.bf16 %v658, %v657
    %v689 = vpack.c.bf16 %v660, %v659
    %v690 = vpack.c.bf16 %v662, %v661
    %v691 = vpack.c.bf16 %v664, %v663
    %v692 = vpack.c.bf16 %v666, %v665
    %v693 = vpack.c.bf16 %v668, %v667
    %v694 = vpack.c.bf16 %v670, %v669
    %v695 = vpack.c.bf16 %v672, %v671
    %v696 = vpack.c.bf16 %v674, %v673
    %v697 = vpack.c.bf16 %v676, %v675
    %v698 = vpack.c.bf16 %v678, %v677
    %v699 = vpack.c.bf16 %v680, %v679
    %v700 = vpack.c.bf16 %v682, %v681
    %v701 = vpack.c.bf16 %v684, %v683
    %v702 = vpack.c.bf16 %v686, %v685
    %v703 = vld [vmem:[%s2] sm:$0xf]
    %v704 = vld [vmem:[%s2 + $0x4] sm:$0xf]
    %v705 = vld [vmem:[%s2 + $0x8] sm:$0xf]
    %v706 = vld [vmem:[%s2 + $0xc] sm:$0xf]
    %v707 = vld [vmem:[%s2 + $0x10] sm:$0xf]
    %v708 = vld [vmem:[%s2 + $0x14] sm:$0xf]
    %v709 = vld [vmem:[%s2 + $0x18] sm:$0xf]
    %v710 = vld [vmem:[%s2 + $0x1c] sm:$0xf]
    %v711 = vld [vmem:[%s2 + $0x20] sm:$0xf]
    %v712 = vld [vmem:[%s2 + $0x24] sm:$0xf]
    %v713 = vld [vmem:[%s2 + $0x28] sm:$0xf]
    %v714 = vld [vmem:[%s2 + $0x2c] sm:$0xf]
    %v715 = vld [vmem:[%s2 + $0x30] sm:$0xf]
    %v716 = vld [vmem:[%s2 + $0x34] sm:$0xf]
    %v717 = vld [vmem:[%s2 + $0x38] sm:$0xf]
    %v718 = vld [vmem:[%s2 + $0x3c] sm:$0xf]
    %v719 = vld [vmem:[%s3] sm:$0x1]
    %v721 = vperm.slane %v719, 0
    %v739 = vunpack.c.l.b16 %v703
    %v740 = vunpack.c.l.b16 %v704
    %v741 = vunpack.c.l.b16 %v705
    %v742 = vunpack.c.l.b16 %v706
    %v743 = vunpack.c.l.b16 %v707
    %v744 = vunpack.c.l.b16 %v708
    %v745 = vunpack.c.l.b16 %v709
    %v746 = vunpack.c.l.b16 %v710
    %v747 = vunpack.c.l.b16 %v711
    %v748 = vunpack.c.l.b16 %v712
    %v749 = vunpack.c.l.b16 %v713
    %v750 = vunpack.c.l.b16 %v714
    %v751 = vunpack.c.l.b16 %v715
    %v752 = vunpack.c.l.b16 %v716
    %v753 = vunpack.c.l.b16 %v717
    %v754 = vunpack.c.l.b16 %v718
    %v755 = vpack.c.b16 %v740, %v739
    %v756 = vpack.c.b16 %v742, %v741
    %v757 = vpack.c.b16 %v744, %v743
    %v758 = vpack.c.b16 %v746, %v745
    %v759 = vpack.c.b16 %v748, %v747
    %v760 = vpack.c.b16 %v750, %v749
    %v761 = vpack.c.b16 %v752, %v751
    %v762 = vpack.c.b16 %v754, %v753
    %771 = vmatpush.bf16.msra.mxu0 %v762
    %772 = vmatpush.bf16.msra.mxu0 %v761
    %773 = vmatpush.bf16.msra.mxu0 %v760
    %774 = vmatpush.bf16.msra.mxu0 %v759
    %775 = vmatpush.bf16.msra.mxu0 %v758
    %776 = vmatpush.bf16.msra.mxu0 %v757
    %777 = vmatpush.bf16.msra.mxu0 %v756
    %778 = vmatpush.bf16.msra.mxu0 %v755
    %779 = vmatmul.bf16.gmra.mxu0 %v687
    %v780 = vpop.f32.mrf.mxu0
    %v781 = vadd.f32 %v721, %v780
    %v782 = vpop.f32.mrf.mxu0
    %v783 = vadd.f32 %v721, %v782
    %784 = vmatmul.bf16.gmra.mxu0 %v688
    %v785 = vpop.f32.mrf.mxu0
    %v786 = vadd.f32 %v721, %v785
    %v787 = vpop.f32.mrf.mxu0
    %v788 = vadd.f32 %v721, %v787
    %789 = vmatmul.bf16.gmra.mxu0 %v689
    %v790 = vpop.f32.mrf.mxu0
    %v791 = vadd.f32 %v721, %v790
    %v792 = vpop.f32.mrf.mxu0
    %v793 = vadd.f32 %v721, %v792
    %794 = vmatmul.bf16.gmra.mxu0 %v690
    %v795 = vpop.f32.mrf.mxu0
    %v796 = vadd.f32 %v721, %v795
    %v797 = vpop.f32.mrf.mxu0
    %v798 = vadd.f32 %v721, %v797
    %799 = vmatmul.bf16.gmra.mxu0 %v691
    %v800 = vpop.f32.mrf.mxu0
    %v801 = vadd.f32 %v721, %v800
    %v802 = vpop.f32.mrf.mxu0
    %v803 = vadd.f32 %v721, %v802
    %804 = vmatmul.bf16.gmra.mxu0 %v692
    %v805 = vpop.f32.mrf.mxu0
    %v806 = vadd.f32 %v721, %v805
    %v807 = vpop.f32.mrf.mxu0
    %v808 = vadd.f32 %v721, %v807
    %809 = vmatmul.bf16.gmra.mxu0 %v693
    %v810 = vpop.f32.mrf.mxu0
    %v811 = vadd.f32 %v721, %v810
    %v812 = vpop.f32.mrf.mxu0
    %v813 = vadd.f32 %v721, %v812
    %814 = vmatmul.bf16.gmra.mxu0 %v694
    %v815 = vpop.f32.mrf.mxu0
    %v816 = vadd.f32 %v721, %v815
    %v817 = vpop.f32.mrf.mxu0
    %v818 = vadd.f32 %v721, %v817
    %819 = vmatmul.bf16.gmra.mxu0 %v695
    %v820 = vpop.f32.mrf.mxu0
    %v821 = vadd.f32 %v721, %v820
    %v822 = vpop.f32.mrf.mxu0
    %v823 = vadd.f32 %v721, %v822
    %824 = vmatmul.bf16.gmra.mxu0 %v696
    %v825 = vpop.f32.mrf.mxu0
    %v826 = vadd.f32 %v721, %v825
    %v827 = vpop.f32.mrf.mxu0
    %v828 = vadd.f32 %v721, %v827
    %829 = vmatmul.bf16.gmra.mxu0 %v697
    %v830 = vpop.f32.mrf.mxu0
    %v831 = vadd.f32 %v721, %v830
    %v832 = vpop.f32.mrf.mxu0
    %v833 = vadd.f32 %v721, %v832
    %834 = vmatmul.bf16.gmra.mxu0 %v698
    %v835 = vpop.f32.mrf.mxu0
    %v836 = vadd.f32 %v721, %v835
    %v837 = vpop.f32.mrf.mxu0
    %v838 = vadd.f32 %v721, %v837
    %839 = vmatmul.bf16.gmra.mxu0 %v699
    %v840 = vpop.f32.mrf.mxu0
    %v841 = vadd.f32 %v721, %v840
    %v842 = vpop.f32.mrf.mxu0
    %v843 = vadd.f32 %v721, %v842
    %844 = vmatmul.bf16.gmra.mxu0 %v700
    %v845 = vpop.f32.mrf.mxu0
    %v846 = vadd.f32 %v721, %v845
    %v847 = vpop.f32.mrf.mxu0
    %v848 = vadd.f32 %v721, %v847
    %849 = vmatmul.bf16.gmra.mxu0 %v701
    %v850 = vpop.f32.mrf.mxu0
    %v851 = vadd.f32 %v721, %v850
    %v852 = vpop.f32.mrf.mxu0
    %v853 = vadd.f32 %v721, %v852
    %854 = vmatmul.bf16.gmra.mxu0 %v702
    %v855 = vpop.f32.mrf.mxu0
    %v856 = vadd.f32 %v721, %v855
    %v857 = vpop.f32.mrf.mxu0
    %v858 = vadd.f32 %v721, %v857
    %859 = vdwg.mxu0
    %860 = vst [vmem:[%s4] sm:$0xff] %v781
    %861 = vst [vmem:[%s4 + $0x8] sm:$0xff] %v783
    %862 = vst [vmem:[%s4 + $0x10] sm:$0xff] %v786
    %863 = vst [vmem:[%s4 + $0x18] sm:$0xff] %v788
    %864 = vst [vmem:[%s4 + $0x20] sm:$0xff] %v791
    %865 = vst [vmem:[%s4 + $0x28] sm:$0xff] %v793
    %866 = vst [vmem:[%s4 + $0x30] sm:$0xff] %v796
    %867 = vst [vmem:[%s4 + $0x38] sm:$0xff] %v798
    %868 = vst [vmem:[%s4 + $0x40] sm:$0xff] %v801
    %869 = vst [vmem:[%s4 + $0x48] sm:$0xff] %v803
    %870 = vst [vmem:[%s4 + $0x50] sm:$0xff] %v806
    %871 = vst [vmem:[%s4 + $0x58] sm:$0xff] %v808
    %872 = vst [vmem:[%s4 + $0x60] sm:$0xff] %v811
    %873 = vst [vmem:[%s4 + $0x68] sm:$0xff] %v813
    %874 = vst [vmem:[%s4 + $0x70] sm:$0xff] %v816
    %875 = vst [vmem:[%s4 + $0x78] sm:$0xff] %v818
    %876 = vst [vmem:[%s4 + $0x80] sm:$0xff] %v821
    %877 = vst [vmem:[%s4 + $0x88] sm:$0xff] %v823
    %878 = vst [vmem:[%s4 + $0x90] sm:$0xff] %v826
    %879 = vst [vmem:[%s4 + $0x98] sm:$0xff] %v828
    %880 = vst [vmem:[%s4 + $0xa0] sm:$0xff] %v831
    %881 = vst [vmem:[%s4 + $0xa8] sm:$0xff] %v833
    %882 = vst [vmem:[%s4 + $0xb0] sm:$0xff] %v836
    %883 = vst [vmem:[%s4 + $0xb8] sm:$0xff] %v838
    %884 = vst [vmem:[%s4 + $0xc0] sm:$0xff] %v841
    %885 = vst [vmem:[%s4 + $0xc8] sm:$0xff] %v843
    %886 = vst [vmem:[%s4 + $0xd0] sm:$0xff] %v846
    %887 = vst [vmem:[%s4 + $0xd8] sm:$0xff] %v848
    %888 = vst [vmem:[%s4 + $0xe0] sm:$0xff] %v851
    %889 = vst [vmem:[%s4 + $0xe8] sm:$0xff] %v853
    %890 = vst [vmem:[%s4 + $0xf0] sm:$0xff] %v856
    %891 = vst [vmem:[%s4 + $0xf8] sm:$0xff] %v858
  $region25: #{gnn_forward.3} parent=0 // pred_fallthru
    _
  // Predicated region
  $region26: #{gnn_forward.3} parent=0 // pred_check
    _
  $region27: #{gnn_forward.3} parent=0 // pred_check_branch
    %893 = sbr.rel (0) target = $region29
  $region28: #{gnn_forward.3} parent=0 // pred_region
    _
  $region29: #{gnn_forward.3} parent=0 // pred_fallthru
    _
  // Predicated region
  $region30: #{gnn_forward.3} parent=0 // pred_check
    _
  $region31: #{gnn_forward.3} parent=0 // pred_check_branch
    %895 = sbr.rel (0) target = $region33
  $region32: #{gnn_forward.3} parent=0 // pred_region
    _
  $region33: #{gnn_forward.3} parent=0 // pred_fallthru
    _

</llo_original>
